<compile_context>
chip_gen: v7x
topology: tpu7x:2x2x1
jax: 0.10.0
libtpu: 0.0.40
codegen_flags: <defaults>
</compile_context>

<pallas_src>
import functools

import jax
import jax.numpy as jnp
import numpy as np
from jax import lax
from jax.experimental import pallas as pl
from jax.experimental.pallas import tpu as pltpu

_LANE = 128                         # vreg lane width
_SUBLANE = 8                        # vreg sublane width
_T_BLK_MAX = 64                     # max timesteps per grid step
_B_BLK_MAX = 256                    # MXU M rows (v6e/v7x); also fine on v5e
_TILE_BUDGET = 24 * 1024 * 1024     # streamed tiles + weights budget (v7x-safe)
_VMEM_CAP = 48 * 1024 * 1024        # cap for vmem_limit_bytes (v7x: 64 MiB phys)


def _round_up(n, m):
    return ((n + m - 1) // m) * m


def _recurrence_vmem_bytes(t_blk, b_blk, g_pad, h_pad):
    stream = 2 * 2 * t_blk * b_blk * (g_pad + h_pad)   # gx in + y out, bf16, 2-buf
    weights = 2 * 2 * h_pad * g_pad                    # W_hh bf16 (default 2-buf)
    scratch = 2 * 4 * b_blk * h_pad                    # h/c state, f32
    return stream + weights + scratch


def _choose_t_blk(T, b_blk, g_pad, h_pad):
    per_t = 2 * 2 * b_blk * (g_pad + h_pad)
    fixed = 2 * 2 * h_pad * g_pad + 2 * 4 * b_blk * h_pad
    by_budget = max(1, (_TILE_BUDGET - fixed) // max(per_t, 1))
    return int(max(1, min(_T_BLK_MAX, T, by_budget)))


# ------------------------------ Pallas kernel --------------------------------

def _lstm_recurrence_kernel(gx_ref, whh_ref, y_ref, h_scr, c_scr, *,
                            hidden, unroll, t_axis):
    """Sequential LSTM cell over one (t_blk, b_blk) tile.

    gx_ref : (t_blk, b_blk, G_pad) bf16 -- precomputed x @ W_ih + b (streamed)
    whh_ref: (H_pad, G_pad)        bf16 -- resident recurrent weight
    y_ref  : (t_blk, b_blk, H_pad) bf16 -- hidden-state output
    h_scr/c_scr: (b_blk, H_pad)    f32  -- state carried across time blocks
    Gate k ([i,f,g,o]) lives in columns [k*H, (k+1)*H) (dense packing);
    padded rows of W_hh and padded lanes of h/c are kept exactly zero.
    """
    Tb, Bb, _ = gx_ref.shape
    Hp = h_scr.shape[-1]
    H = hidden

    @pl.when(pl.program_id(t_axis) == 0)
    def _():
        h_scr[...] = jnp.zeros_like(h_scr)
        c_scr[...] = jnp.zeros_like(c_scr)

    pad_cols = Hp - H
    zpad = jnp.zeros((Bb, pad_cols), jnp.float32) if pad_cols else None  # hoisted

    def step(t, carry):
        h, c = carry                                   # (Bb, Hp) f32
        # Only the serial recurrent matmul runs inside the loop: bf16 operands,
        # f32 accumulation. Gate / state math stays f32 (v5e: no bf16 VPU/EUP).
        gates = gx_ref[t].astype(jnp.float32) + jnp.dot(
            h.astype(whh_ref.dtype), whh_ref[...],
            preferred_element_type=jnp.float32)        # (Bb, G_pad)
        i_g = jax.nn.sigmoid(gates[:, 0 * H:1 * H])
        f_g = jax.nn.sigmoid(gates[:, 1 * H:2 * H])
        g_g = jnp.tanh(gates[:, 2 * H:3 * H])
        o_g = jax.nn.sigmoid(gates[:, 3 * H:4 * H])
        c_new = f_g * c[:, :H] + i_g * g_g
        h_new = o_g * jnp.tanh(c_new)                  # (Bb, H)
        if pad_cols:                                   # keep padded lanes == 0
            c_new = jnp.concatenate([c_new, zpad], axis=-1)
            h_new = jnp.concatenate([h_new, zpad], axis=-1)
        y_ref[t] = h_new.astype(y_ref.dtype)           # lane-dense (Bb, Hp) store
        return (h_new, c_new)

    h_fin, c_fin = lax.fori_loop(0, Tb, step, (h_scr[...], c_scr[...]),
                                 unroll=unroll)
    h_scr[...] = h_fin
    c_scr[...] = c_fin


def lstm_recurrence(gx_pad, whh_pad, *, hidden, t_blk, b_blk, unroll):
    """gx_pad: (T_pad, B_pad, G_pad) bf16; whh_pad: (H_pad, G_pad) bf16
    -> (T_pad, B_pad, H_pad) bf16 hidden-state sequence."""
    T_pad, B_pad, G_pad = gx_pad.shape
    H_pad = whh_pad.shape[0]
    n_b = B_pad // b_blk
    n_t = T_pad // t_blk

    if n_b == 1:
        # One batch block covers the whole batch: drop the batch grid axis.
        grid = (n_t,)
        t_axis = 0
        gx_spec = pl.BlockSpec((t_blk, b_blk, G_pad), lambda t: (t, 0, 0))
        w_spec = pl.BlockSpec((H_pad, G_pad), lambda t: (0, 0))
        y_spec = pl.BlockSpec((t_blk, b_blk, H_pad), lambda t: (t, 0, 0))
        dims = ("arbitrary",)
    else:
        # Leading parallel batch axis (megacore); time axis is the recurrence.
        grid = (n_b, n_t)
        t_axis = 1
        gx_spec = pl.BlockSpec((t_blk, b_blk, G_pad), lambda b, t: (t, b, 0))
        w_spec = pl.BlockSpec((H_pad, G_pad), lambda b, t: (0, 0))
        y_spec = pl.BlockSpec((t_blk, b_blk, H_pad), lambda b, t: (t, b, 0))
        dims = ("parallel", "arbitrary")

    vmem_limit = int(min(
        _VMEM_CAP,
        max(32 * 1024 * 1024,
            2 * _recurrence_vmem_bytes(t_blk, b_blk, G_pad, H_pad))))

    kernel = functools.partial(_lstm_recurrence_kernel,
                               hidden=hidden, unroll=unroll, t_axis=t_axis)

    return pl.pallas_call(
        kernel,
        out_shape=jax.ShapeDtypeStruct((T_pad, B_pad, H_pad), jnp.bfloat16),
        grid_spec=pltpu.PrefetchScalarGridSpec(
            num_scalar_prefetch=0,
            grid=grid,
            in_specs=[gx_spec, w_spec],
            out_specs=y_spec,
            scratch_shapes=[
                pltpu.VMEM((b_blk, H_pad), jnp.float32),   # h state
                pltpu.VMEM((b_blk, H_pad), jnp.float32),   # c state
            ],
        ),
        compiler_params=pltpu.CompilerParams(
            dimension_semantics=dims,
            vmem_limit_bytes=vmem_limit,
        ),
    )(gx_pad, whh_pad)


# ----------------------------- params / packing ------------------------------

def init_params(key, input_size, hidden_size, output_size, num_layers):
    """PyTorch-layout params; init U(-1/sqrt(H), 1/sqrt(H)) like nn.LSTM/Linear."""
    layers = []
    k = 1.0 / np.sqrt(hidden_size)
    keys = jax.random.split(key, num_layers * 4 + 2)
    idx = 0
    for layer in range(num_layers):
        d_in = input_size if layer == 0 else hidden_size
        wih = jax.random.uniform(keys[idx], (4 * hidden_size, d_in),
                                 jnp.float32, -k, k); idx += 1
        whh = jax.random.uniform(keys[idx], (4 * hidden_size, hidden_size),
                                 jnp.float32, -k, k); idx += 1
        bih = jax.random.uniform(keys[idx], (4 * hidden_size,),
                                 jnp.float32, -k, k); idx += 1
        bhh = jax.random.uniform(keys[idx], (4 * hidden_size,),
                                 jnp.float32, -k, k); idx += 1
        layers.append((wih, whh, bih, bhh))
    w_out = jax.random.uniform(keys[idx], (output_size, hidden_size),
                               jnp.float32, -k, k); idx += 1
    b_out = jax.random.uniform(keys[idx], (output_size,),
                               jnp.float32, -k, k)
    return {"layers": layers, "w_out": w_out, "b_out": b_out}


def pack_params(params, hidden_size):
    """Repack into the padded, dense-gate kernel layout (bf16 matmul operands).

    Gate k occupies columns [k*H, (k+1)*H); all padding (extra gate columns,
    extra W_hh rows) is zero so padded hidden lanes stay inert.
    """
    H = hidden_size
    G = 4 * H
    G_pad = _round_up(G, _LANE)
    H_pad = _round_up(H, _LANE)

    packed_layers = []
    for (wih, whh, bih, bhh) in params["layers"]:
        d_in = wih.shape[1]
        wih_t = jnp.zeros((d_in, G_pad), jnp.float32).at[:, :G].set(wih.T)
        whh_t = jnp.zeros((H_pad, G_pad), jnp.float32).at[:H, :G].set(whh.T)
        bias = jnp.zeros((G_pad,), jnp.float32).at[:G].set(bih + bhh)
        packed_layers.append((wih_t.astype(jnp.bfloat16),     # (d_in, G_pad)
                              whh_t.astype(jnp.bfloat16),     # (H_pad, G_pad)
                              bias))                          # (G_pad,) f32
    return {"layers": packed_layers,
            "w_out_t": params["w_out"].T,                     # (H, O) f32
            "b_out": params["b_out"][None, :]}                # (1, O) f32


# ------------------------------ model wrapper --------------------------------

@jax.jit
def lstm_forward(x, packed):
    """x: (T, B, input_size) f32 -> (T, B, output_size) f32.
    Sequence-major, zero initial state: nn.LSTM(...)(x, None) + nn.Linear."""
    T, B, _ = x.shape
    H = packed["w_out_t"].shape[0]
    H_pad = packed["layers"][0][1].shape[0]
    G_pad = packed["layers"][0][1].shape[1]

    b_blk = min(_round_up(B, _SUBLANE), _B_BLK_MAX)
    B_pad = _round_up(_round_up(B, _SUBLANE), b_blk)
    t_blk = _choose_t_blk(T, b_blk, G_pad, H_pad)
    T_pad = _round_up(T, t_blk)
    unroll = min(8, t_blk)

    h = x.astype(jnp.bfloat16)
    for (wih_t, whh_t, bias) in packed["layers"]:
        # Hoisted input projection: one big fully-parallel matmul in XLA whose
        # result is streamed to the kernel and hidden under the recurrence by
        # the BlockSpec pipeline (review: take x @ W_ih off the critical path).
        gx = jnp.dot(h, wih_t, preferred_element_type=jnp.float32) + bias
        gx_pad = jnp.zeros((T_pad, B_pad, G_pad), jnp.bfloat16)
        gx_pad = gx_pad.at[:T, :B, :].set(gx.astype(jnp.bfloat16))
        y = lstm_recurrence(gx_pad, whh_t, hidden=H,
                            t_blk=t_blk, b_blk=b_blk, unroll=unroll)
        h = y[:T, :B, :H]                    # bf16 inter-layer activations

    # Output Linear head (H -> 1) in plain XLA (1-lane-wide Pallas output
    # would be 100% masked stores + launch overhead).
    return jnp.dot(h.astype(jnp.float32), packed["w_out_t"]) + packed["b_out"]


# ------------------------- pure-JAX reference (check) ------------------------

def lstm_forward_ref(x, params):
    H = params["layers"][0][1].shape[1]          # whh: (4H, H)
    h_seq = x
    for (wih, whh, bih, bhh) in params["layers"]:
        T, B, _ = h_seq.shape
        wih_t, whh_t = wih.T, whh.T
        b = (bih + bhh)[None, :]

        def step(carry, x_t, wih_t=wih_t, whh_t=whh_t, b=b):
            h, c = carry
            gates = x_t @ wih_t + h @ whh_t + b
            i = jax.nn.sigmoid(gates[:, 0 * H:1 * H])
            f = jax.nn.sigmoid(gates[:, 1 * H:2 * H])
            g = jnp.tanh(gates[:, 2 * H:3 * H])
            o = jax.nn.sigmoid(gates[:, 3 * H:4 * H])
            c = f * c + i * g
            h = o * jnp.tanh(c)
            return (h, c), h

        init = (jnp.zeros((B, H), jnp.float32), jnp.zeros((B, H), jnp.float32))
        _, h_seq = jax.lax.scan(step, init, h_seq)
    return h_seq @ params["w_out"].T + params["b_out"][None, :]


# ----------------------------------- main ------------------------------------

if __name__ == "__main__":
    T, B = 8, 4
    input_size, hidden_size, output_size, num_layers = 16, 32, 1, 2

    key = jax.random.PRNGKey(0)
    k_x, k_p = jax.random.split(key)
    x = jax.random.normal(k_x, (T, B, input_size), jnp.float32)
    params = init_params(k_p, input_size, hidden_size, output_size, num_layers)
    packed = pack_params(params, hidden_size)

    out = jax.block_until_ready(lstm_forward(x, packed))

    ref = lstm_forward_ref(x, params)
    assert out.shape == (T, B, output_size)
    # bf16 weights / activations (f32 accumulation & state) per the perf
    # review -> compare against the all-f32 reference at a loosened tolerance.
    np.testing.assert_allclose(np.asarray(out), np.asarray(ref),
                               rtol=3e-2, atol=3e-2)
    print("KERNEL_OK")
</pallas_src>

<mosaic_0001>
module attributes {stable_mosaic.version = 11 : i64} {
  func.func @_lstm_recurrence_kernel(%arg0: i32, %arg1: memref<8x8x128xbf16, #tpu.memory_space<vmem>>, %arg2: memref<128x128xbf16, #tpu.memory_space<vmem>>, %arg3: memref<8x8x128xbf16, #tpu.memory_space<vmem>>, %arg4: memref<8x128xf32, #tpu.memory_space<vmem>>, %arg5: memref<8x128xf32, #tpu.memory_space<vmem>>) attributes {dimension_semantics = [#tpu.dimension_semantics<arbitrary>], iteration_bounds = array<i64: 1>, scalar_prefetch = 0 : i64, scratch_operands = 2 : i64, tpu.core_type = #tpu.core_type<tc>, window_params = [{transform_indices = @transform_0, window_bounds = array<i64: 8, 8, 128>}, {pipeline_mode = #tpu.pipeline_mode<synchronous>, transform_indices = @transform_1, window_bounds = array<i64: 128, 128>}, {transform_indices = @transform_2, window_bounds = array<i64: 8, 8, 128>}]} {
    %c0_i32 = arith.constant 0 : i32
    %0 = arith.cmpi eq, %arg0, %c0_i32 : i32
    %1 = arith.extui %0 : i1 to i32
    %c0_i32_0 = arith.constant 0 : i32
    %2 = arith.cmpi ne, %1, %c0_i32_0 : i32
    scf.if %2 {
      %cst_89 = arith.constant 0.000000e+00 : f32
      %336 = vector.broadcast %cst_89 : f32 to vector<8x128xf32>
      %c0_90 = arith.constant 0 : index
      %c0_91 = arith.constant 0 : index
      %337 = vector.load %arg4[%c0_90, %c0_91] : memref<8x128xf32, #tpu.memory_space<vmem>>, vector<8x128xf32>
      tpu.vector_store %arg4[%c0_90, %c0_91], %336 {strides = array<i32>} : memref<8x128xf32, #tpu.memory_space<vmem>>, vector<8x128xf32>,
      %cst_92 = arith.constant 0.000000e+00 : f32
      %338 = vector.broadcast %cst_92 : f32 to vector<8x128xf32>
      %c0_93 = arith.constant 0 : index
      %c0_94 = arith.constant 0 : index
      %339 = vector.load %arg5[%c0_93, %c0_94] : memref<8x128xf32, #tpu.memory_space<vmem>>, vector<8x128xf32>
      tpu.vector_store %arg5[%c0_93, %c0_94], %338 {strides = array<i32>} : memref<8x128xf32, #tpu.memory_space<vmem>>, vector<8x128xf32>,
    } else {
    }
    %cst = arith.constant 0.000000e+00 : f32
    %3 = vector.broadcast %cst : f32 to vector<8x96xf32>
    %c0 = arith.constant 0 : index
    %c0_1 = arith.constant 0 : index
    %4 = vector.load %arg4[%c0, %c0_1] : memref<8x128xf32, #tpu.memory_space<vmem>>, vector<8x128xf32>
    %c0_2 = arith.constant 0 : index
    %c0_3 = arith.constant 0 : index
    %5 = vector.load %arg5[%c0_2, %c0_3] : memref<8x128xf32, #tpu.memory_space<vmem>>, vector<8x128xf32>
    %c0_i32_4 = arith.constant 0 : i32
    %6 = arith.index_cast %c0_i32_4 : i32 to index
    %c0_5 = arith.constant 0 : index
    %c0_6 = arith.constant 0 : index
    %7 = vector.load %arg1[%6, %c0_5, %c0_6] : memref<8x8x128xbf16, #tpu.memory_space<vmem>>, vector<1x8x128xbf16>
    %8 = vector.shape_cast %7 : vector<1x8x128xbf16> to vector<8x128xbf16>
    %9 = arith.extf %8 : vector<8x128xbf16> to vector<8x128xf32>
    %10 = arith.truncf %4 : vector<8x128xf32> to vector<8x128xbf16>
    %c0_7 = arith.constant 0 : index
    %c0_8 = arith.constant 0 : index
    %11 = vector.load %arg2[%c0_7, %c0_8] : memref<128x128xbf16, #tpu.memory_space<vmem>>, vector<128x128xbf16>
    %cst_9 = arith.constant dense<0.000000e+00> : vector<8x128xf32>
    %12 = tpu.matmul %10, %11, %cst_9 {dimension_numbers = #tpu.dot_dimension_numbers<[1], [0], [0], [1], [0, 0, 1, 1], [], []>} : vector<8x128xbf16>, vector<128x128xbf16>, vector<8x128xf32> -> vector<8x128xf32>
    %13 = arith.addf %9, %12 : vector<8x128xf32>
    %14 = vector.extract_strided_slice %13 {offsets = [0, 0], sizes = [8, 32], strides = [1, 1]} : vector<8x128xf32> to vector<8x32xf32>
    %15 = arith.negf %14 : vector<8x32xf32>
    %16 = math.exp %15 : vector<8x32xf32>
    %cst_10 = arith.constant 1.000000e+00 : f32
    %17 = vector.broadcast %cst_10 : f32 to vector<8x32xf32>
    %18 = arith.addf %17, %16 : vector<8x32xf32>
    %19 = arith.divf %17, %18 : vector<8x32xf32>
    %20 = vector.extract_strided_slice %13 {offsets = [0, 32], sizes = [8, 32], strides = [1, 1]} : vector<8x128xf32> to vector<8x32xf32>
    %21 = arith.negf %20 : vector<8x32xf32>
    %22 = math.exp %21 : vector<8x32xf32>
    %cst_11 = arith.constant 1.000000e+00 : f32
    %23 = vector.broadcast %cst_11 : f32 to vector<8x32xf32>
    %24 = arith.addf %23, %22 : vector<8x32xf32>
    %25 = arith.divf %23, %24 : vector<8x32xf32>
    %26 = vector.extract_strided_slice %13 {offsets = [0, 64], sizes = [8, 32], strides = [1, 1]} : vector<8x128xf32> to vector<8x32xf32>
    %27 = math.tanh %26 : vector<8x32xf32>
    %28 = vector.extract_strided_slice %13 {offsets = [0, 96], sizes = [8, 32], strides = [1, 1]} : vector<8x128xf32> to vector<8x32xf32>
    %29 = arith.negf %28 : vector<8x32xf32>
    %30 = math.exp %29 : vector<8x32xf32>
    %cst_12 = arith.constant 1.000000e+00 : f32
    %31 = vector.broadcast %cst_12 : f32 to vector<8x32xf32>
    %32 = arith.addf %31, %30 : vector<8x32xf32>
    %33 = arith.divf %31, %32 : vector<8x32xf32>
    %34 = vector.extract_strided_slice %5 {offsets = [0, 0], sizes = [8, 32], strides = [1, 1]} : vector<8x128xf32> to vector<8x32xf32>
    %35 = arith.mulf %25, %34 : vector<8x32xf32>
    %36 = arith.mulf %19, %27 : vector<8x32xf32>
    %37 = arith.addf %35, %36 : vector<8x32xf32>
    %38 = math.tanh %37 : vector<8x32xf32>
    %39 = arith.mulf %33, %38 : vector<8x32xf32>
    %40 = tpu.concatenate %37, %3 in 1 : vector<8x32xf32>, vector<8x96xf32> -> vector<8x128xf32>
    %41 = tpu.concatenate %39, %3 in 1 : vector<8x32xf32>, vector<8x96xf32> -> vector<8x128xf32>
    %42 = arith.truncf %41 : vector<8x128xf32> to vector<8x128xbf16>
    %43 = arith.index_cast %c0_i32_4 : i32 to index
    %c0_13 = arith.constant 0 : index
    %c0_14 = arith.constant 0 : index
    %44 = vector.load %arg3[%43, %c0_13, %c0_14] : memref<8x8x128xbf16, #tpu.memory_space<vmem>>, vector<1x8x128xbf16>
    %45 = vector.shape_cast %44 : vector<1x8x128xbf16> to vector<8x128xbf16>
    %46 = vector.shape_cast %42 : vector<8x128xbf16> to vector<1x8x128xbf16>
    tpu.vector_store %arg3[%43, %c0_13, %c0_14], %46 {strides = array<i32>} : memref<8x8x128xbf16, #tpu.memory_space<vmem>>, vector<1x8x128xbf16>,
    %c1_i32 = arith.constant 1 : i32
    %47 = arith.index_cast %c1_i32 : i32 to index
    %c0_15 = arith.constant 0 : index
    %c0_16 = arith.constant 0 : index
    %48 = vector.load %arg1[%47, %c0_15, %c0_16] : memref<8x8x128xbf16, #tpu.memory_space<vmem>>, vector<1x8x128xbf16>
    %49 = vector.shape_cast %48 : vector<1x8x128xbf16> to vector<8x128xbf16>
    %50 = arith.extf %49 : vector<8x128xbf16> to vector<8x128xf32>
    %51 = arith.truncf %41 : vector<8x128xf32> to vector<8x128xbf16>
    %c0_17 = arith.constant 0 : index
    %c0_18 = arith.constant 0 : index
    %52 = vector.load %arg2[%c0_17, %c0_18] : memref<128x128xbf16, #tpu.memory_space<vmem>>, vector<128x128xbf16>
    %cst_19 = arith.constant dense<0.000000e+00> : vector<8x128xf32>
    %53 = tpu.matmul %51, %52, %cst_19 {dimension_numbers = #tpu.dot_dimension_numbers<[1], [0], [0], [1], [0, 0, 1, 1], [], []>} : vector<8x128xbf16>, vector<128x128xbf16>, vector<8x128xf32> -> vector<8x128xf32>
    %54 = arith.addf %50, %53 : vector<8x128xf32>
    %55 = vector.extract_strided_slice %54 {offsets = [0, 0], sizes = [8, 32], strides = [1, 1]} : vector<8x128xf32> to vector<8x32xf32>
    %56 = arith.negf %55 : vector<8x32xf32>
    %57 = math.exp %56 : vector<8x32xf32>
    %cst_20 = arith.constant 1.000000e+00 : f32
    %58 = vector.broadcast %cst_20 : f32 to vector<8x32xf32>
    %59 = arith.addf %58, %57 : vector<8x32xf32>
    %60 = arith.divf %58, %59 : vector<8x32xf32>
    %61 = vector.extract_strided_slice %54 {offsets = [0, 32], sizes = [8, 32], strides = [1, 1]} : vector<8x128xf32> to vector<8x32xf32>
    %62 = arith.negf %61 : vector<8x32xf32>
    %63 = math.exp %62 : vector<8x32xf32>
    %cst_21 = arith.constant 1.000000e+00 : f32
    %64 = vector.broadcast %cst_21 : f32 to vector<8x32xf32>
    %65 = arith.addf %64, %63 : vector<8x32xf32>
    %66 = arith.divf %64, %65 : vector<8x32xf32>
    %67 = vector.extract_strided_slice %54 {offsets = [0, 64], sizes = [8, 32], strides = [1, 1]} : vector<8x128xf32> to vector<8x32xf32>
    %68 = math.tanh %67 : vector<8x32xf32>
    %69 = vector.extract_strided_slice %54 {offsets = [0, 96], sizes = [8, 32], strides = [1, 1]} : vector<8x128xf32> to vector<8x32xf32>
    %70 = arith.negf %69 : vector<8x32xf32>
    %71 = math.exp %70 : vector<8x32xf32>
    %cst_22 = arith.constant 1.000000e+00 : f32
    %72 = vector.broadcast %cst_22 : f32 to vector<8x32xf32>
    %73 = arith.addf %72, %71 : vector<8x32xf32>
    %74 = arith.divf %72, %73 : vector<8x32xf32>
    %75 = vector.extract_strided_slice %40 {offsets = [0, 0], sizes = [8, 32], strides = [1, 1]} : vector<8x128xf32> to vector<8x32xf32>
    %76 = arith.mulf %66, %75 : vector<8x32xf32>
    %77 = arith.mulf %60, %68 : vector<8x32xf32>
    %78 = arith.addf %76, %77 : vector<8x32xf32>
    %79 = math.tanh %78 : vector<8x32xf32>
    %80 = arith.mulf %74, %79 : vector<8x32xf32>
    %81 = tpu.concatenate %78, %3 in 1 : vector<8x32xf32>, vector<8x96xf32> -> vector<8x128xf32>
    %82 = tpu.concatenate %80, %3 in 1 : vector<8x32xf32>, vector<8x96xf32> -> vector<8x128xf32>
    %83 = arith.truncf %82 : vector<8x128xf32> to vector<8x128xbf16>
    %84 = arith.index_cast %c1_i32 : i32 to index
    %c0_23 = arith.constant 0 : index
    %c0_24 = arith.constant 0 : index
    %85 = vector.load %arg3[%84, %c0_23, %c0_24] : memref<8x8x128xbf16, #tpu.memory_space<vmem>>, vector<1x8x128xbf16>
    %86 = vector.shape_cast %85 : vector<1x8x128xbf16> to vector<8x128xbf16>
    %87 = vector.shape_cast %83 : vector<8x128xbf16> to vector<1x8x128xbf16>
    tpu.vector_store %arg3[%84, %c0_23, %c0_24], %87 {strides = array<i32>} : memref<8x8x128xbf16, #tpu.memory_space<vmem>>, vector<1x8x128xbf16>,
    %c2_i32 = arith.constant 2 : i32
    %88 = arith.index_cast %c2_i32 : i32 to index
    %c0_25 = arith.constant 0 : index
    %c0_26 = arith.constant 0 : index
    %89 = vector.load %arg1[%88, %c0_25, %c0_26] : memref<8x8x128xbf16, #tpu.memory_space<vmem>>, vector<1x8x128xbf16>
    %90 = vector.shape_cast %89 : vector<1x8x128xbf16> to vector<8x128xbf16>
    %91 = arith.extf %90 : vector<8x128xbf16> to vector<8x128xf32>
    %92 = arith.truncf %82 : vector<8x128xf32> to vector<8x128xbf16>
    %c0_27 = arith.constant 0 : index
    %c0_28 = arith.constant 0 : index
    %93 = vector.load %arg2[%c0_27, %c0_28] : memref<128x128xbf16, #tpu.memory_space<vmem>>, vector<128x128xbf16>
    %cst_29 = arith.constant dense<0.000000e+00> : vector<8x128xf32>
    %94 = tpu.matmul %92, %93, %cst_29 {dimension_numbers = #tpu.dot_dimension_numbers<[1], [0], [0], [1], [0, 0, 1, 1], [], []>} : vector<8x128xbf16>, vector<128x128xbf16>, vector<8x128xf32> -> vector<8x128xf32>
    %95 = arith.addf %91, %94 : vector<8x128xf32>
    %96 = vector.extract_strided_slice %95 {offsets = [0, 0], sizes = [8, 32], strides = [1, 1]} : vector<8x128xf32> to vector<8x32xf32>
    %97 = arith.negf %96 : vector<8x32xf32>
    %98 = math.exp %97 : vector<8x32xf32>
    %cst_30 = arith.constant 1.000000e+00 : f32
    %99 = vector.broadcast %cst_30 : f32 to vector<8x32xf32>
    %100 = arith.addf %99, %98 : vector<8x32xf32>
    %101 = arith.divf %99, %100 : vector<8x32xf32>
    %102 = vector.extract_strided_slice %95 {offsets = [0, 32], sizes = [8, 32], strides = [1, 1]} : vector<8x128xf32> to vector<8x32xf32>
    %103 = arith.negf %102 : vector<8x32xf32>
    %104 = math.exp %103 : vector<8x32xf32>
    %cst_31 = arith.constant 1.000000e+00 : f32
    %105 = vector.broadcast %cst_31 : f32 to vector<8x32xf32>
    %106 = arith.addf %105, %104 : vector<8x32xf32>
    %107 = arith.divf %105, %106 : vector<8x32xf32>
    %108 = vector.extract_strided_slice %95 {offsets = [0, 64], sizes = [8, 32], strides = [1, 1]} : vector<8x128xf32> to vector<8x32xf32>
    %109 = math.tanh %108 : vector<8x32xf32>
    %110 = vector.extract_strided_slice %95 {offsets = [0, 96], sizes = [8, 32], strides = [1, 1]} : vector<8x128xf32> to vector<8x32xf32>
    %111 = arith.negf %110 : vector<8x32xf32>
    %112 = math.exp %111 : vector<8x32xf32>
    %cst_32 = arith.constant 1.000000e+00 : f32
    %113 = vector.broadcast %cst_32 : f32 to vector<8x32xf32>
    %114 = arith.addf %113, %112 : vector<8x32xf32>
    %115 = arith.divf %113, %114 : vector<8x32xf32>
    %116 = vector.extract_strided_slice %81 {offsets = [0, 0], sizes = [8, 32], strides = [1, 1]} : vector<8x128xf32> to vector<8x32xf32>
    %117 = arith.mulf %107, %116 : vector<8x32xf32>
    %118 = arith.mulf %101, %109 : vector<8x32xf32>
    %119 = arith.addf %117, %118 : vector<8x32xf32>
    %120 = math.tanh %119 : vector<8x32xf32>
    %121 = arith.mulf %115, %120 : vector<8x32xf32>
    %122 = tpu.concatenate %119, %3 in 1 : vector<8x32xf32>, vector<8x96xf32> -> vector<8x128xf32>
    %123 = tpu.concatenate %121, %3 in 1 : vector<8x32xf32>, vector<8x96xf32> -> vector<8x128xf32>
    %124 = arith.truncf %123 : vector<8x128xf32> to vector<8x128xbf16>
    %125 = arith.index_cast %c2_i32 : i32 to index
    %c0_33 = arith.constant 0 : index
    %c0_34 = arith.constant 0 : index
    %126 = vector.load %arg3[%125, %c0_33, %c0_34] : memref<8x8x128xbf16, #tpu.memory_space<vmem>>, vector<1x8x128xbf16>
    %127 = vector.shape_cast %126 : vector<1x8x128xbf16> to vector<8x128xbf16>
    %128 = vector.shape_cast %124 : vector<8x128xbf16> to vector<1x8x128xbf16>
    tpu.vector_store %arg3[%125, %c0_33, %c0_34], %128 {strides = array<i32>} : memref<8x8x128xbf16, #tpu.memory_space<vmem>>, vector<1x8x128xbf16>,
    %c3_i32 = arith.constant 3 : i32
    %129 = arith.index_cast %c3_i32 : i32 to index
    %c0_35 = arith.constant 0 : index
    %c0_36 = arith.constant 0 : index
    %130 = vector.load %arg1[%129, %c0_35, %c0_36] : memref<8x8x128xbf16, #tpu.memory_space<vmem>>, vector<1x8x128xbf16>
    %131 = vector.shape_cast %130 : vector<1x8x128xbf16> to vector<8x128xbf16>
    %132 = arith.extf %131 : vector<8x128xbf16> to vector<8x128xf32>
    %133 = arith.truncf %123 : vector<8x128xf32> to vector<8x128xbf16>
    %c0_37 = arith.constant 0 : index
    %c0_38 = arith.constant 0 : index
    %134 = vector.load %arg2[%c0_37, %c0_38] : memref<128x128xbf16, #tpu.memory_space<vmem>>, vector<128x128xbf16>
    %cst_39 = arith.constant dense<0.000000e+00> : vector<8x128xf32>
    %135 = tpu.matmul %133, %134, %cst_39 {dimension_numbers = #tpu.dot_dimension_numbers<[1], [0], [0], [1], [0, 0, 1, 1], [], []>} : vector<8x128xbf16>, vector<128x128xbf16>, vector<8x128xf32> -> vector<8x128xf32>
    %136 = arith.addf %132, %135 : vector<8x128xf32>
    %137 = vector.extract_strided_slice %136 {offsets = [0, 0], sizes = [8, 32], strides = [1, 1]} : vector<8x128xf32> to vector<8x32xf32>
    %138 = arith.negf %137 : vector<8x32xf32>
    %139 = math.exp %138 : vector<8x32xf32>
    %cst_40 = arith.constant 1.000000e+00 : f32
    %140 = vector.broadcast %cst_40 : f32 to vector<8x32xf32>
    %141 = arith.addf %140, %139 : vector<8x32xf32>
    %142 = arith.divf %140, %141 : vector<8x32xf32>
    %143 = vector.extract_strided_slice %136 {offsets = [0, 32], sizes = [8, 32], strides = [1, 1]} : vector<8x128xf32> to vector<8x32xf32>
    %144 = arith.negf %143 : vector<8x32xf32>
    %145 = math.exp %144 : vector<8x32xf32>
    %cst_41 = arith.constant 1.000000e+00 : f32
    %146 = vector.broadcast %cst_41 : f32 to vector<8x32xf32>
    %147 = arith.addf %146, %145 : vector<8x32xf32>
    %148 = arith.divf %146, %147 : vector<8x32xf32>
    %149 = vector.extract_strided_slice %136 {offsets = [0, 64], sizes = [8, 32], strides = [1, 1]} : vector<8x128xf32> to vector<8x32xf32>
    %150 = math.tanh %149 : vector<8x32xf32>
    %151 = vector.extract_strided_slice %136 {offsets = [0, 96], sizes = [8, 32], strides = [1, 1]} : vector<8x128xf32> to vector<8x32xf32>
    %152 = arith.negf %151 : vector<8x32xf32>
    %153 = math.exp %152 : vector<8x32xf32>
    %cst_42 = arith.constant 1.000000e+00 : f32
    %154 = vector.broadcast %cst_42 : f32 to vector<8x32xf32>
    %155 = arith.addf %154, %153 : vector<8x32xf32>
    %156 = arith.divf %154, %155 : vector<8x32xf32>
    %157 = vector.extract_strided_slice %122 {offsets = [0, 0], sizes = [8, 32], strides = [1, 1]} : vector<8x128xf32> to vector<8x32xf32>
    %158 = arith.mulf %148, %157 : vector<8x32xf32>
    %159 = arith.mulf %142, %150 : vector<8x32xf32>
    %160 = arith.addf %158, %159 : vector<8x32xf32>
    %161 = math.tanh %160 : vector<8x32xf32>
    %162 = arith.mulf %156, %161 : vector<8x32xf32>
    %163 = tpu.concatenate %160, %3 in 1 : vector<8x32xf32>, vector<8x96xf32> -> vector<8x128xf32>
    %164 = tpu.concatenate %162, %3 in 1 : vector<8x32xf32>, vector<8x96xf32> -> vector<8x128xf32>
    %165 = arith.truncf %164 : vector<8x128xf32> to vector<8x128xbf16>
    %166 = arith.index_cast %c3_i32 : i32 to index
    %c0_43 = arith.constant 0 : index
    %c0_44 = arith.constant 0 : index
    %167 = vector.load %arg3[%166, %c0_43, %c0_44] : memref<8x8x128xbf16, #tpu.memory_space<vmem>>, vector<1x8x128xbf16>
    %168 = vector.shape_cast %167 : vector<1x8x128xbf16> to vector<8x128xbf16>
    %169 = vector.shape_cast %165 : vector<8x128xbf16> to vector<1x8x128xbf16>
    tpu.vector_store %arg3[%166, %c0_43, %c0_44], %169 {strides = array<i32>} : memref<8x8x128xbf16, #tpu.memory_space<vmem>>, vector<1x8x128xbf16>,
    %c4_i32 = arith.constant 4 : i32
    %170 = arith.index_cast %c4_i32 : i32 to index
    %c0_45 = arith.constant 0 : index
    %c0_46 = arith.constant 0 : index
    %171 = vector.load %arg1[%170, %c0_45, %c0_46] : memref<8x8x128xbf16, #tpu.memory_space<vmem>>, vector<1x8x128xbf16>
    %172 = vector.shape_cast %171 : vector<1x8x128xbf16> to vector<8x128xbf16>
    %173 = arith.extf %172 : vector<8x128xbf16> to vector<8x128xf32>
    %174 = arith.truncf %164 : vector<8x128xf32> to vector<8x128xbf16>
    %c0_47 = arith.constant 0 : index
    %c0_48 = arith.constant 0 : index
    %175 = vector.load %arg2[%c0_47, %c0_48] : memref<128x128xbf16, #tpu.memory_space<vmem>>, vector<128x128xbf16>
    %cst_49 = arith.constant dense<0.000000e+00> : vector<8x128xf32>
    %176 = tpu.matmul %174, %175, %cst_49 {dimension_numbers = #tpu.dot_dimension_numbers<[1], [0], [0], [1], [0, 0, 1, 1], [], []>} : vector<8x128xbf16>, vector<128x128xbf16>, vector<8x128xf32> -> vector<8x128xf32>
    %177 = arith.addf %173, %176 : vector<8x128xf32>
    %178 = vector.extract_strided_slice %177 {offsets = [0, 0], sizes = [8, 32], strides = [1, 1]} : vector<8x128xf32> to vector<8x32xf32>
    %179 = arith.negf %178 : vector<8x32xf32>
    %180 = math.exp %179 : vector<8x32xf32>
    %cst_50 = arith.constant 1.000000e+00 : f32
    %181 = vector.broadcast %cst_50 : f32 to vector<8x32xf32>
    %182 = arith.addf %181, %180 : vector<8x32xf32>
    %183 = arith.divf %181, %182 : vector<8x32xf32>
    %184 = vector.extract_strided_slice %177 {offsets = [0, 32], sizes = [8, 32], strides = [1, 1]} : vector<8x128xf32> to vector<8x32xf32>
    %185 = arith.negf %184 : vector<8x32xf32>
    %186 = math.exp %185 : vector<8x32xf32>
    %cst_51 = arith.constant 1.000000e+00 : f32
    %187 = vector.broadcast %cst_51 : f32 to vector<8x32xf32>
    %188 = arith.addf %187, %186 : vector<8x32xf32>
    %189 = arith.divf %187, %188 : vector<8x32xf32>
    %190 = vector.extract_strided_slice %177 {offsets = [0, 64], sizes = [8, 32], strides = [1, 1]} : vector<8x128xf32> to vector<8x32xf32>
    %191 = math.tanh %190 : vector<8x32xf32>
    %192 = vector.extract_strided_slice %177 {offsets = [0, 96], sizes = [8, 32], strides = [1, 1]} : vector<8x128xf32> to vector<8x32xf32>
    %193 = arith.negf %192 : vector<8x32xf32>
    %194 = math.exp %193 : vector<8x32xf32>
    %cst_52 = arith.constant 1.000000e+00 : f32
    %195 = vector.broadcast %cst_52 : f32 to vector<8x32xf32>
    %196 = arith.addf %195, %194 : vector<8x32xf32>
    %197 = arith.divf %195, %196 : vector<8x32xf32>
    %198 = vector.extract_strided_slice %163 {offsets = [0, 0], sizes = [8, 32], strides = [1, 1]} : vector<8x128xf32> to vector<8x32xf32>
    %199 = arith.mulf %189, %198 : vector<8x32xf32>
    %200 = arith.mulf %183, %191 : vector<8x32xf32>
    %201 = arith.addf %199, %200 : vector<8x32xf32>
    %202 = math.tanh %201 : vector<8x32xf32>
    %203 = arith.mulf %197, %202 : vector<8x32xf32>
    %204 = tpu.concatenate %201, %3 in 1 : vector<8x32xf32>, vector<8x96xf32> -> vector<8x128xf32>
    %205 = tpu.concatenate %203, %3 in 1 : vector<8x32xf32>, vector<8x96xf32> -> vector<8x128xf32>
    %206 = arith.truncf %205 : vector<8x128xf32> to vector<8x128xbf16>
    %207 = arith.index_cast %c4_i32 : i32 to index
    %c0_53 = arith.constant 0 : index
    %c0_54 = arith.constant 0 : index
    %208 = vector.load %arg3[%207, %c0_53, %c0_54] : memref<8x8x128xbf16, #tpu.memory_space<vmem>>, vector<1x8x128xbf16>
    %209 = vector.shape_cast %208 : vector<1x8x128xbf16> to vector<8x128xbf16>
    %210 = vector.shape_cast %206 : vector<8x128xbf16> to vector<1x8x128xbf16>
    tpu.vector_store %arg3[%207, %c0_53, %c0_54], %210 {strides = array<i32>} : memref<8x8x128xbf16, #tpu.memory_space<vmem>>, vector<1x8x128xbf16>,
    %c5_i32 = arith.constant 5 : i32
    %211 = arith.index_cast %c5_i32 : i32 to index
    %c0_55 = arith.constant 0 : index
    %c0_56 = arith.constant 0 : index
    %212 = vector.load %arg1[%211, %c0_55, %c0_56] : memref<8x8x128xbf16, #tpu.memory_space<vmem>>, vector<1x8x128xbf16>
    %213 = vector.shape_cast %212 : vector<1x8x128xbf16> to vector<8x128xbf16>
    %214 = arith.extf %213 : vector<8x128xbf16> to vector<8x128xf32>
    %215 = arith.truncf %205 : vector<8x128xf32> to vector<8x128xbf16>
    %c0_57 = arith.constant 0 : index
    %c0_58 = arith.constant 0 : index
    %216 = vector.load %arg2[%c0_57, %c0_58] : memref<128x128xbf16, #tpu.memory_space<vmem>>, vector<128x128xbf16>
    %cst_59 = arith.constant dense<0.000000e+00> : vector<8x128xf32>
    %217 = tpu.matmul %215, %216, %cst_59 {dimension_numbers = #tpu.dot_dimension_numbers<[1], [0], [0], [1], [0, 0, 1, 1], [], []>} : vector<8x128xbf16>, vector<128x128xbf16>, vector<8x128xf32> -> vector<8x128xf32>
    %218 = arith.addf %214, %217 : vector<8x128xf32>
    %219 = vector.extract_strided_slice %218 {offsets = [0, 0], sizes = [8, 32], strides = [1, 1]} : vector<8x128xf32> to vector<8x32xf32>
    %220 = arith.negf %219 : vector<8x32xf32>
    %221 = math.exp %220 : vector<8x32xf32>
    %cst_60 = arith.constant 1.000000e+00 : f32
    %222 = vector.broadcast %cst_60 : f32 to vector<8x32xf32>
    %223 = arith.addf %222, %221 : vector<8x32xf32>
    %224 = arith.divf %222, %223 : vector<8x32xf32>
    %225 = vector.extract_strided_slice %218 {offsets = [0, 32], sizes = [8, 32], strides = [1, 1]} : vector<8x128xf32> to vector<8x32xf32>
    %226 = arith.negf %225 : vector<8x32xf32>
    %227 = math.exp %226 : vector<8x32xf32>
    %cst_61 = arith.constant 1.000000e+00 : f32
    %228 = vector.broadcast %cst_61 : f32 to vector<8x32xf32>
    %229 = arith.addf %228, %227 : vector<8x32xf32>
    %230 = arith.divf %228, %229 : vector<8x32xf32>
    %231 = vector.extract_strided_slice %218 {offsets = [0, 64], sizes = [8, 32], strides = [1, 1]} : vector<8x128xf32> to vector<8x32xf32>
    %232 = math.tanh %231 : vector<8x32xf32>
    %233 = vector.extract_strided_slice %218 {offsets = [0, 96], sizes = [8, 32], strides = [1, 1]} : vector<8x128xf32> to vector<8x32xf32>
    %234 = arith.negf %233 : vector<8x32xf32>
    %235 = math.exp %234 : vector<8x32xf32>
    %cst_62 = arith.constant 1.000000e+00 : f32
    %236 = vector.broadcast %cst_62 : f32 to vector<8x32xf32>
    %237 = arith.addf %236, %235 : vector<8x32xf32>
    %238 = arith.divf %236, %237 : vector<8x32xf32>
    %239 = vector.extract_strided_slice %204 {offsets = [0, 0], sizes = [8, 32], strides = [1, 1]} : vector<8x128xf32> to vector<8x32xf32>
    %240 = arith.mulf %230, %239 : vector<8x32xf32>
    %241 = arith.mulf %224, %232 : vector<8x32xf32>
    %242 = arith.addf %240, %241 : vector<8x32xf32>
    %243 = math.tanh %242 : vector<8x32xf32>
    %244 = arith.mulf %238, %243 : vector<8x32xf32>
    %245 = tpu.concatenate %242, %3 in 1 : vector<8x32xf32>, vector<8x96xf32> -> vector<8x128xf32>
    %246 = tpu.concatenate %244, %3 in 1 : vector<8x32xf32>, vector<8x96xf32> -> vector<8x128xf32>
    %247 = arith.truncf %246 : vector<8x128xf32> to vector<8x128xbf16>
    %248 = arith.index_cast %c5_i32 : i32 to index
    %c0_63 = arith.constant 0 : index
    %c0_64 = arith.constant 0 : index
    %249 = vector.load %arg3[%248, %c0_63, %c0_64] : memref<8x8x128xbf16, #tpu.memory_space<vmem>>, vector<1x8x128xbf16>
    %250 = vector.shape_cast %249 : vector<1x8x128xbf16> to vector<8x128xbf16>
    %251 = vector.shape_cast %247 : vector<8x128xbf16> to vector<1x8x128xbf16>
    tpu.vector_store %arg3[%248, %c0_63, %c0_64], %251 {strides = array<i32>} : memref<8x8x128xbf16, #tpu.memory_space<vmem>>, vector<1x8x128xbf16>,
    %c6_i32 = arith.constant 6 : i32
    %252 = arith.index_cast %c6_i32 : i32 to index
    %c0_65 = arith.constant 0 : index
    %c0_66 = arith.constant 0 : index
    %253 = vector.load %arg1[%252, %c0_65, %c0_66] : memref<8x8x128xbf16, #tpu.memory_space<vmem>>, vector<1x8x128xbf16>
    %254 = vector.shape_cast %253 : vector<1x8x128xbf16> to vector<8x128xbf16>
    %255 = arith.extf %254 : vector<8x128xbf16> to vector<8x128xf32>
    %256 = arith.truncf %246 : vector<8x128xf32> to vector<8x128xbf16>
    %c0_67 = arith.constant 0 : index
    %c0_68 = arith.constant 0 : index
    %257 = vector.load %arg2[%c0_67, %c0_68] : memref<128x128xbf16, #tpu.memory_space<vmem>>, vector<128x128xbf16>
    %cst_69 = arith.constant dense<0.000000e+00> : vector<8x128xf32>
    %258 = tpu.matmul %256, %257, %cst_69 {dimension_numbers = #tpu.dot_dimension_numbers<[1], [0], [0], [1], [0, 0, 1, 1], [], []>} : vector<8x128xbf16>, vector<128x128xbf16>, vector<8x128xf32> -> vector<8x128xf32>
    %259 = arith.addf %255, %258 : vector<8x128xf32>
    %260 = vector.extract_strided_slice %259 {offsets = [0, 0], sizes = [8, 32], strides = [1, 1]} : vector<8x128xf32> to vector<8x32xf32>
    %261 = arith.negf %260 : vector<8x32xf32>
    %262 = math.exp %261 : vector<8x32xf32>
    %cst_70 = arith.constant 1.000000e+00 : f32
    %263 = vector.broadcast %cst_70 : f32 to vector<8x32xf32>
    %264 = arith.addf %263, %262 : vector<8x32xf32>
    %265 = arith.divf %263, %264 : vector<8x32xf32>
    %266 = vector.extract_strided_slice %259 {offsets = [0, 32], sizes = [8, 32], strides = [1, 1]} : vector<8x128xf32> to vector<8x32xf32>
    %267 = arith.negf %266 : vector<8x32xf32>
    %268 = math.exp %267 : vector<8x32xf32>
    %cst_71 = arith.constant 1.000000e+00 : f32
    %269 = vector.broadcast %cst_71 : f32 to vector<8x32xf32>
    %270 = arith.addf %269, %268 : vector<8x32xf32>
    %271 = arith.divf %269, %270 : vector<8x32xf32>
    %272 = vector.extract_strided_slice %259 {offsets = [0, 64], sizes = [8, 32], strides = [1, 1]} : vector<8x128xf32> to vector<8x32xf32>
    %273 = math.tanh %272 : vector<8x32xf32>
    %274 = vector.extract_strided_slice %259 {offsets = [0, 96], sizes = [8, 32], strides = [1, 1]} : vector<8x128xf32> to vector<8x32xf32>
    %275 = arith.negf %274 : vector<8x32xf32>
    %276 = math.exp %275 : vector<8x32xf32>
    %cst_72 = arith.constant 1.000000e+00 : f32
    %277 = vector.broadcast %cst_72 : f32 to vector<8x32xf32>
    %278 = arith.addf %277, %276 : vector<8x32xf32>
    %279 = arith.divf %277, %278 : vector<8x32xf32>
    %280 = vector.extract_strided_slice %245 {offsets = [0, 0], sizes = [8, 32], strides = [1, 1]} : vector<8x128xf32> to vector<8x32xf32>
    %281 = arith.mulf %271, %280 : vector<8x32xf32>
    %282 = arith.mulf %265, %273 : vector<8x32xf32>
    %283 = arith.addf %281, %282 : vector<8x32xf32>
    %284 = math.tanh %283 : vector<8x32xf32>
    %285 = arith.mulf %279, %284 : vector<8x32xf32>
    %286 = tpu.concatenate %283, %3 in 1 : vector<8x32xf32>, vector<8x96xf32> -> vector<8x128xf32>
    %287 = tpu.concatenate %285, %3 in 1 : vector<8x32xf32>, vector<8x96xf32> -> vector<8x128xf32>
    %288 = arith.truncf %287 : vector<8x128xf32> to vector<8x128xbf16>
    %289 = arith.index_cast %c6_i32 : i32 to index
    %c0_73 = arith.constant 0 : index
    %c0_74 = arith.constant 0 : index
    %290 = vector.load %arg3[%289, %c0_73, %c0_74] : memref<8x8x128xbf16, #tpu.memory_space<vmem>>, vector<1x8x128xbf16>
    %291 = vector.shape_cast %290 : vector<1x8x128xbf16> to vector<8x128xbf16>
    %292 = vector.shape_cast %288 : vector<8x128xbf16> to vector<1x8x128xbf16>
    tpu.vector_store %arg3[%289, %c0_73, %c0_74], %292 {strides = array<i32>} : memref<8x8x128xbf16, #tpu.memory_space<vmem>>, vector<1x8x128xbf16>,
    %c7_i32 = arith.constant 7 : i32
    %293 = arith.index_cast %c7_i32 : i32 to index
    %c0_75 = arith.constant 0 : index
    %c0_76 = arith.constant 0 : index
    %294 = vector.load %arg1[%293, %c0_75, %c0_76] : memref<8x8x128xbf16, #tpu.memory_space<vmem>>, vector<1x8x128xbf16>
    %295 = vector.shape_cast %294 : vector<1x8x128xbf16> to vector<8x128xbf16>
    %296 = arith.extf %295 : vector<8x128xbf16> to vector<8x128xf32>
    %297 = arith.truncf %287 : vector<8x128xf32> to vector<8x128xbf16>
    %c0_77 = arith.constant 0 : index
    %c0_78 = arith.constant 0 : index
    %298 = vector.load %arg2[%c0_77, %c0_78] : memref<128x128xbf16, #tpu.memory_space<vmem>>, vector<128x128xbf16>
    %cst_79 = arith.constant dense<0.000000e+00> : vector<8x128xf32>
    %299 = tpu.matmul %297, %298, %cst_79 {dimension_numbers = #tpu.dot_dimension_numbers<[1], [0], [0], [1], [0, 0, 1, 1], [], []>} : vector<8x128xbf16>, vector<128x128xbf16>, vector<8x128xf32> -> vector<8x128xf32>
    %300 = arith.addf %296, %299 : vector<8x128xf32>
    %301 = vector.extract_strided_slice %300 {offsets = [0, 0], sizes = [8, 32], strides = [1, 1]} : vector<8x128xf32> to vector<8x32xf32>
    %302 = arith.negf %301 : vector<8x32xf32>
    %303 = math.exp %302 : vector<8x32xf32>
    %cst_80 = arith.constant 1.000000e+00 : f32
    %304 = vector.broadcast %cst_80 : f32 to vector<8x32xf32>
    %305 = arith.addf %304, %303 : vector<8x32xf32>
    %306 = arith.divf %304, %305 : vector<8x32xf32>
    %307 = vector.extract_strided_slice %300 {offsets = [0, 32], sizes = [8, 32], strides = [1, 1]} : vector<8x128xf32> to vector<8x32xf32>
    %308 = arith.negf %307 : vector<8x32xf32>
    %309 = math.exp %308 : vector<8x32xf32>
    %cst_81 = arith.constant 1.000000e+00 : f32
    %310 = vector.broadcast %cst_81 : f32 to vector<8x32xf32>
    %311 = arith.addf %310, %309 : vector<8x32xf32>
    %312 = arith.divf %310, %311 : vector<8x32xf32>
    %313 = vector.extract_strided_slice %300 {offsets = [0, 64], sizes = [8, 32], strides = [1, 1]} : vector<8x128xf32> to vector<8x32xf32>
    %314 = math.tanh %313 : vector<8x32xf32>
    %315 = vector.extract_strided_slice %300 {offsets = [0, 96], sizes = [8, 32], strides = [1, 1]} : vector<8x128xf32> to vector<8x32xf32>
    %316 = arith.negf %315 : vector<8x32xf32>
    %317 = math.exp %316 : vector<8x32xf32>
    %cst_82 = arith.constant 1.000000e+00 : f32
    %318 = vector.broadcast %cst_82 : f32 to vector<8x32xf32>
    %319 = arith.addf %318, %317 : vector<8x32xf32>
    %320 = arith.divf %318, %319 : vector<8x32xf32>
    %321 = vector.extract_strided_slice %286 {offsets = [0, 0], sizes = [8, 32], strides = [1, 1]} : vector<8x128xf32> to vector<8x32xf32>
    %322 = arith.mulf %312, %321 : vector<8x32xf32>
    %323 = arith.mulf %306, %314 : vector<8x32xf32>
    %324 = arith.addf %322, %323 : vector<8x32xf32>
    %325 = math.tanh %324 : vector<8x32xf32>
    %326 = arith.mulf %320, %325 : vector<8x32xf32>
    %327 = tpu.concatenate %324, %3 in 1 : vector<8x32xf32>, vector<8x96xf32> -> vector<8x128xf32>
    %328 = tpu.concatenate %326, %3 in 1 : vector<8x32xf32>, vector<8x96xf32> -> vector<8x128xf32>
    %329 = arith.truncf %328 : vector<8x128xf32> to vector<8x128xbf16>
    %330 = arith.index_cast %c7_i32 : i32 to index
    %c0_83 = arith.constant 0 : index
    %c0_84 = arith.constant 0 : index
    %331 = vector.load %arg3[%330, %c0_83, %c0_84] : memref<8x8x128xbf16, #tpu.memory_space<vmem>>, vector<1x8x128xbf16>
    %332 = vector.shape_cast %331 : vector<1x8x128xbf16> to vector<8x128xbf16>
    %333 = vector.shape_cast %329 : vector<8x128xbf16> to vector<1x8x128xbf16>
    tpu.vector_store %arg3[%330, %c0_83, %c0_84], %333 {strides = array<i32>} : memref<8x8x128xbf16, #tpu.memory_space<vmem>>, vector<1x8x128xbf16>,
    %c8_i32 = arith.constant 8 : i32
    %c0_85 = arith.constant 0 : index
    %c0_86 = arith.constant 0 : index
    %334 = vector.load %arg4[%c0_85, %c0_86] : memref<8x128xf32, #tpu.memory_space<vmem>>, vector<8x128xf32>
    tpu.vector_store %arg4[%c0_85, %c0_86], %328 {strides = array<i32>} : memref<8x128xf32, #tpu.memory_space<vmem>>, vector<8x128xf32>,
    %c0_87 = arith.constant 0 : index
    %c0_88 = arith.constant 0 : index
    %335 = vector.load %arg5[%c0_87, %c0_88] : memref<8x128xf32, #tpu.memory_space<vmem>>, vector<8x128xf32>
    tpu.vector_store %arg5[%c0_87, %c0_88], %327 {strides = array<i32>} : memref<8x128xf32, #tpu.memory_space<vmem>>, vector<8x128xf32>,
    return
  }
  func.func @transform_0(%arg0: i32) -> (i32, i32, i32) {
    %c0_i32 = arith.constant 0 : i32
    %c0_i32_0 = arith.constant 0 : i32
    %c0_i32_1 = arith.constant 0 : i32
    return %arg0, %c0_i32, %c0_i32_0 : i32, i32, i32
  }
  func.func @transform_1(%arg0: i32) -> (i32, i32) {
    %c0_i32 = arith.constant 0 : i32
    %c0_i32_0 = arith.constant 0 : i32
    %c0_i32_1 = arith.constant 0 : i32
    return %c0_i32, %c0_i32_0 : i32, i32
  }
  func.func @transform_2(%arg0: i32) -> (i32, i32, i32) {
    %c0_i32 = arith.constant 0 : i32
    %c0_i32_0 = arith.constant 0 : i32
    %c0_i32_1 = arith.constant 0 : i32
    return %arg0, %c0_i32, %c0_i32_0 : i32, i32, i32
  }
}

</mosaic_0001>

<llo_original>
// kernel: lstm_forward.2
$region0: #{lstm_forward.2}
  #allocation0 [shape = 'u32[]', space=smem, size = 0x4, offset = 0x4, fixed_abs, tag = 'smem constant byte address 0x4 - core index']
  #allocation1 [shape = 'u32[144,128]{1,0:T(1,128)}', space=vmem, size = 0x12000, scoped, tag = 'internal scratch']
  #allocation2 [shape = 'f32[8,128]{1,0:T(8,128)}', space=vmem, size = 0x1000, scoped, tag = 'scratch operand']
  #allocation3 [shape = 'f32[8,128]{1,0:T(8,128)}', space=vmem, size = 0x1000, scoped, tag = 'scratch operand']
  %s0 = inlined_call_operand.vmem [shape: bf16[8,8,128], index: 0, kind: input, shape index: {}]
  %s1 = inlined_call_operand.vmem [shape: bf16[128,128], index: 1, kind: input, shape index: {}]
  %s2 = inlined_call_operand.vmem [shape: bf16[8,8,128], index: 2, kind: output, shape index: {}]
  %s3 = sld [smem:[#allocation0]]
  $region22: #{lstm_forward.2} parent=0
    _
  %s5 = ssub.s32 1, %s3
  %s6 = scalar_select 0, %s5, %s3
  // Predicated region
  $region2: #{lstm_forward.2} parent=0 // pred_check
    _
  $region3: #{lstm_forward.2} parent=0 // pred_check_branch
    %8 = sbr.rel (0) target = $region5
  $region4: #{lstm_forward.2} parent=0 // pred_region
    _
  $region5: #{lstm_forward.2} parent=0 // pred_fallthru
    _
  // Predicated region
  $region6: #{lstm_forward.2} parent=0 // pred_check
    _
  $region7: #{lstm_forward.2} parent=0 // pred_check_branch
    %10 = sbr.rel (0) target = $region9
  $region8: #{lstm_forward.2} parent=0 // pred_region
    _
  $region9: #{lstm_forward.2} parent=0 // pred_fallthru
    _
  %p12 = scmp.eq.s32.totalorder 0, 0
  // Predicated region
  $region10: #{lstm_forward.2} parent=0 // pred_check
    %p13 = pneg %p12
  $region11: #{lstm_forward.2} parent=0 // pred_check_branch
    %15 = sbr.rel (%p13) target = $region13
  $region12: #{lstm_forward.2} parent=0 // pred_region
    %16 = vst [vmem:[#allocation2] sm:$0xff] 0.0
    %17 = vst [vmem:[#allocation3] sm:$0xff] 0.0
  $region13: #{lstm_forward.2} parent=0 // pred_fallthru
    _
  %v18 = vld [vmem:[#allocation2] sm:$0xff]
  %v19 = vld [vmem:[#allocation3] sm:$0xff]
  %v20 = vld [vmem:[%s0] sm:$0xf]
  %v21 = vunpack.c.l.bf16 %v20
  %v22 = vpack.c.bf16 %v18, %v18
  %v23 = vld [vmem:[%s1] sm:$0xf]
  %v24 = vld [vmem:[%s1 + $0x4] sm:$0xf]
  %v25 = vld [vmem:[%s1 + $0x8] sm:$0xf]
  %v26 = vld [vmem:[%s1 + $0xc] sm:$0xf]
  %v27 = vld [vmem:[%s1 + $0x10] sm:$0xf]
  %v28 = vld [vmem:[%s1 + $0x14] sm:$0xf]
  %v29 = vld [vmem:[%s1 + $0x18] sm:$0xf]
  %v30 = vld [vmem:[%s1 + $0x1c] sm:$0xf]
  %v31 = vld [vmem:[%s1 + $0x20] sm:$0xf]
  %v32 = vld [vmem:[%s1 + $0x24] sm:$0xf]
  %v33 = vld [vmem:[%s1 + $0x28] sm:$0xf]
  %v34 = vld [vmem:[%s1 + $0x2c] sm:$0xf]
  %v35 = vld [vmem:[%s1 + $0x30] sm:$0xf]
  %v36 = vld [vmem:[%s1 + $0x34] sm:$0xf]
  %v37 = vld [vmem:[%s1 + $0x38] sm:$0xf]
  %v38 = vld [vmem:[%s1 + $0x3c] sm:$0xf]
  %v55 = vunpack.c.l.b16 %v23
  %v56 = vunpack.c.l.b16 %v24
  %v57 = vunpack.c.l.b16 %v25
  %v58 = vunpack.c.l.b16 %v26
  %v59 = vunpack.c.l.b16 %v27
  %v60 = vunpack.c.l.b16 %v28
  %v61 = vunpack.c.l.b16 %v29
  %v62 = vunpack.c.l.b16 %v30
  %v63 = vunpack.c.l.b16 %v31
  %v64 = vunpack.c.l.b16 %v32
  %v65 = vunpack.c.l.b16 %v33
  %v66 = vunpack.c.l.b16 %v34
  %v67 = vunpack.c.l.b16 %v35
  %v68 = vunpack.c.l.b16 %v36
  %v69 = vunpack.c.l.b16 %v37
  %v70 = vunpack.c.l.b16 %v38
  %v71 = vpack.c.b16 %v56, %v55
  %v72 = vpack.c.b16 %v58, %v57
  %v73 = vpack.c.b16 %v60, %v59
  %v74 = vpack.c.b16 %v62, %v61
  %v75 = vpack.c.b16 %v64, %v63
  %v76 = vpack.c.b16 %v66, %v65
  %v77 = vpack.c.b16 %v68, %v67
  %v78 = vpack.c.b16 %v70, %v69
  %87 = vmatprep.subr.bf16.mxu0 0
  %88 = vmatpush1.bf16.msra.mxu0 %v71
  %89 = vmatprep.subr.bf16.mxu0 0
  %90 = vmatpush1.bf16.msra.mxu0 %v72
  %91 = vmatprep.subr.bf16.mxu0 0
  %92 = vmatpush1.bf16.msra.mxu0 %v73
  %93 = vmatprep.subr.bf16.mxu0 0
  %94 = vmatpush1.bf16.msra.mxu0 %v74
  %95 = vmatprep.subr.bf16.mxu0 0
  %96 = vmatpush1.bf16.msra.mxu0 %v75
  %97 = vmatprep.subr.bf16.mxu0 0
  %98 = vmatpush1.bf16.msra.mxu0 %v76
  %99 = vmatprep.subr.bf16.mxu0 0
  %100 = vmatpush1.bf16.msra.mxu0 %v77
  %101 = vmatprep.subr.bf16.mxu0 0
  %102 = vmatpush1.bf16.msra.mxu0 %v78
  %103 = vmatprep.subr.bf16.mxu0 0
  %104 = vmatpush1.bf16.msra.mxu0 0
  %105 = vmatprep.subr.bf16.mxu0 0
  %106 = vmatpush1.bf16.msra.mxu0 0
  %107 = vmatprep.subr.bf16.mxu0 0
  %108 = vmatpush1.bf16.msra.mxu0 0
  %109 = vmatprep.subr.bf16.mxu0 0
  %110 = vmatpush1.bf16.msra.mxu0 0
  %111 = vmatprep.subr.bf16.mxu0 0
  %112 = vmatpush1.bf16.msra.mxu0 0
  %113 = vmatprep.subr.bf16.mxu0 0
  %114 = vmatpush1.bf16.msra.mxu0 0
  %115 = vmatprep.subr.bf16.mxu0 0
  %116 = vmatpush1.bf16.msra.mxu0 0
  %117 = vmatprep.subr.bf16.mxu0 0
  %118 = vmatpush1.bf16.msra.mxu0 0
  %119 = vmatprep.mubr.bf16.mxu0 0
  %120 = vmatmul.mubr.bf16.gmra.mrb[0].mxu0 %v22
  %v121 = vpop.f32.mrb[0].mxu0
  %v122 = vadd.f32 0.0, %v121
  %v123 = vpop.f32.mrb[0].mxu0
  %v124 = vpop.f32.mrb[0].mxu0
  %v125 = vpop.f32.mrb[0].mxu0
  %126 = vdwg.mxu0
  %v127 = vadd.f32 %v21, %v122
  %v128 = vxor.u32 %v127, 2147483648
  %v129 = vmul.f32 %v128, 1.442695
  %v130 = vpow.pop %v129
  %v131 = vadd.f32 %v130, 1.0
  %v132 = vrcp.pop %v131
  %v133 = vmul.f32 1.0, %v132
  %v134 = vtanh.pop %v127
  %136 = vrot.lane.b32.xlu0 %v19, 32
  %v137 = vpop.permute.xlu0 %136
  %v139 = vmul.f32 %v133, %v137
  %141 = vrot.lane.b32.xlu0 %v134, 64
  %v142 = vpop.permute.xlu0 %141
  %v144 = vmul.f32 %v133, %v142
  %146 = vrot.lane.b32.xlu0 %v144, 32
  %v147 = vpop.permute.xlu0 %146
  %v149 = vadd.f32 %v139, %v147
  %v150 = vtanh.pop %v149
  %152 = vrot.lane.b32.xlu0 %v150, 64
  %v153 = vpop.permute.xlu0 %152
  %v155 = vmul.f32 %v133, %v153
  %157 = vrot.lane.b32.xlu0 %v149, 96
  %v158 = vpop.permute.xlu0 %157
  %vm160 = vcmask 261120
  %v161 = vsel %vm160, %v158, 0.0
  %163 = vrot.lane.b32.xlu0 %v155, 32
  %v164 = vpop.permute.xlu0 %163
  %v166 = vsel %vm160, %v164, 0.0
  %v167 = vpack.c.bf16 %v166, %v166
  %168 = vst [vmem:[%s2] sm:$0xf] %v167
  %s169 = scalar_lea.vmem %s0, 4
  %v170 = vld [vmem:[%s169] sm:$0xf]
  %v171 = vunpack.c.l.bf16 %v170
  %v172 = vld [vmem:[%s1] sm:$0xf]
  %v173 = vld [vmem:[%s1 + $0x4] sm:$0xf]
  %v174 = vld [vmem:[%s1 + $0x8] sm:$0xf]
  %v175 = vld [vmem:[%s1 + $0xc] sm:$0xf]
  %v176 = vld [vmem:[%s1 + $0x10] sm:$0xf]
  %v177 = vld [vmem:[%s1 + $0x14] sm:$0xf]
  %v178 = vld [vmem:[%s1 + $0x18] sm:$0xf]
  %v179 = vld [vmem:[%s1 + $0x1c] sm:$0xf]
  %v180 = vld [vmem:[%s1 + $0x20] sm:$0xf]
  %v181 = vld [vmem:[%s1 + $0x24] sm:$0xf]
  %v182 = vld [vmem:[%s1 + $0x28] sm:$0xf]
  %v183 = vld [vmem:[%s1 + $0x2c] sm:$0xf]
  %v184 = vld [vmem:[%s1 + $0x30] sm:$0xf]
  %v185 = vld [vmem:[%s1 + $0x34] sm:$0xf]
  %v186 = vld [vmem:[%s1 + $0x38] sm:$0xf]
  %v187 = vld [vmem:[%s1 + $0x3c] sm:$0xf]
  %v204 = vunpack.c.l.b16 %v172
  %v205 = vunpack.c.l.b16 %v173
  %v206 = vunpack.c.l.b16 %v174
  %v207 = vunpack.c.l.b16 %v175
  %v208 = vunpack.c.l.b16 %v176
  %v209 = vunpack.c.l.b16 %v177
  %v210 = vunpack.c.l.b16 %v178
  %v211 = vunpack.c.l.b16 %v179
  %v212 = vunpack.c.l.b16 %v180
  %v213 = vunpack.c.l.b16 %v181
  %v214 = vunpack.c.l.b16 %v182
  %v215 = vunpack.c.l.b16 %v183
  %v216 = vunpack.c.l.b16 %v184
  %v217 = vunpack.c.l.b16 %v185
  %v218 = vunpack.c.l.b16 %v186
  %v219 = vunpack.c.l.b16 %v187
  %v220 = vpack.c.b16 %v205, %v204
  %v221 = vpack.c.b16 %v207, %v206
  %v222 = vpack.c.b16 %v209, %v208
  %v223 = vpack.c.b16 %v211, %v210
  %v224 = vpack.c.b16 %v213, %v212
  %v225 = vpack.c.b16 %v215, %v214
  %v226 = vpack.c.b16 %v217, %v216
  %v227 = vpack.c.b16 %v219, %v218
  %236 = vmatprep.subr.bf16.mxu0 0
  %237 = vmatpush1.bf16.msra.mxu0 %v220
  %238 = vmatprep.subr.bf16.mxu0 0
  %239 = vmatpush1.bf16.msra.mxu0 %v221
  %240 = vmatprep.subr.bf16.mxu0 0
  %241 = vmatpush1.bf16.msra.mxu0 %v222
  %242 = vmatprep.subr.bf16.mxu0 0
  %243 = vmatpush1.bf16.msra.mxu0 %v223
  %244 = vmatprep.subr.bf16.mxu0 0
  %245 = vmatpush1.bf16.msra.mxu0 %v224
  %246 = vmatprep.subr.bf16.mxu0 0
  %247 = vmatpush1.bf16.msra.mxu0 %v225
  %248 = vmatprep.subr.bf16.mxu0 0
  %249 = vmatpush1.bf16.msra.mxu0 %v226
  %250 = vmatprep.subr.bf16.mxu0 0
  %251 = vmatpush1.bf16.msra.mxu0 %v227
  %252 = vmatprep.subr.bf16.mxu0 0
  %253 = vmatpush1.bf16.msra.mxu0 0
  %254 = vmatprep.subr.bf16.mxu0 0
  %255 = vmatpush1.bf16.msra.mxu0 0
  %256 = vmatprep.subr.bf16.mxu0 0
  %257 = vmatpush1.bf16.msra.mxu0 0
  %258 = vmatprep.subr.bf16.mxu0 0
  %259 = vmatpush1.bf16.msra.mxu0 0
  %260 = vmatprep.subr.bf16.mxu0 0
  %261 = vmatpush1.bf16.msra.mxu0 0
  %262 = vmatprep.subr.bf16.mxu0 0
  %263 = vmatpush1.bf16.msra.mxu0 0
  %264 = vmatprep.subr.bf16.mxu0 0
  %265 = vmatpush1.bf16.msra.mxu0 0
  %266 = vmatprep.subr.bf16.mxu0 0
  %267 = vmatpush1.bf16.msra.mxu0 0
  %268 = vmatprep.mubr.bf16.mxu0 0
  %269 = vmatmul.mubr.bf16.gmra.mrb[0].mxu0 %v167
  %v270 = vpop.f32.mrb[0].mxu0
  %v271 = vadd.f32 0.0, %v270
  %v272 = vpop.f32.mrb[0].mxu0
  %v273 = vpop.f32.mrb[0].mxu0
  %v274 = vpop.f32.mrb[0].mxu0
  %275 = vdwg.mxu0
  %v276 = vadd.f32 %v171, %v271
  %v277 = vxor.u32 %v276, 2147483648
  %v278 = vmul.f32 %v277, 1.442695
  %v279 = vpow.pop %v278
  %v280 = vadd.f32 %v279, 1.0
  %v281 = vrcp.pop %v280
  %v282 = vmul.f32 1.0, %v281
  %v283 = vtanh.pop %v276
  %285 = vrot.lane.b32.xlu0 %v161, 32
  %v286 = vpop.permute.xlu0 %285
  %v288 = vmul.f32 %v282, %v286
  %290 = vrot.lane.b32.xlu0 %v283, 64
  %v291 = vpop.permute.xlu0 %290
  %v293 = vmul.f32 %v282, %v291
  %295 = vrot.lane.b32.xlu0 %v293, 32
  %v296 = vpop.permute.xlu0 %295
  %v298 = vadd.f32 %v288, %v296
  %v299 = vtanh.pop %v298
  %301 = vrot.lane.b32.xlu0 %v299, 64
  %v302 = vpop.permute.xlu0 %301
  %v304 = vmul.f32 %v282, %v302
  %306 = vrot.lane.b32.xlu0 %v298, 96
  %v307 = vpop.permute.xlu0 %306
  %v309 = vsel %vm160, %v307, 0.0
  %311 = vrot.lane.b32.xlu0 %v304, 32
  %v312 = vpop.permute.xlu0 %311
  %v314 = vsel %vm160, %v312, 0.0
  %v315 = vpack.c.bf16 %v314, %v314
  %s316 = scalar_lea.vmem %s2, 4
  %317 = vst [vmem:[%s316] sm:$0xf] %v315
  %s318 = scalar_lea.vmem %s0, 8
  %v319 = vld [vmem:[%s318] sm:$0xf]
  %v320 = vunpack.c.l.bf16 %v319
  %v321 = vld [vmem:[%s1] sm:$0xf]
  %v322 = vld [vmem:[%s1 + $0x4] sm:$0xf]
  %v323 = vld [vmem:[%s1 + $0x8] sm:$0xf]
  %v324 = vld [vmem:[%s1 + $0xc] sm:$0xf]
  %v325 = vld [vmem:[%s1 + $0x10] sm:$0xf]
  %v326 = vld [vmem:[%s1 + $0x14] sm:$0xf]
  %v327 = vld [vmem:[%s1 + $0x18] sm:$0xf]
  %v328 = vld [vmem:[%s1 + $0x1c] sm:$0xf]
  %v329 = vld [vmem:[%s1 + $0x20] sm:$0xf]
  %v330 = vld [vmem:[%s1 + $0x24] sm:$0xf]
  %v331 = vld [vmem:[%s1 + $0x28] sm:$0xf]
  %v332 = vld [vmem:[%s1 + $0x2c] sm:$0xf]
  %v333 = vld [vmem:[%s1 + $0x30] sm:$0xf]
  %v334 = vld [vmem:[%s1 + $0x34] sm:$0xf]
  %v335 = vld [vmem:[%s1 + $0x38] sm:$0xf]
  %v336 = vld [vmem:[%s1 + $0x3c] sm:$0xf]
  %v353 = vunpack.c.l.b16 %v321
  %v354 = vunpack.c.l.b16 %v322
  %v355 = vunpack.c.l.b16 %v323
  %v356 = vunpack.c.l.b16 %v324
  %v357 = vunpack.c.l.b16 %v325
  %v358 = vunpack.c.l.b16 %v326
  %v359 = vunpack.c.l.b16 %v327
  %v360 = vunpack.c.l.b16 %v328
  %v361 = vunpack.c.l.b16 %v329
  %v362 = vunpack.c.l.b16 %v330
  %v363 = vunpack.c.l.b16 %v331
  %v364 = vunpack.c.l.b16 %v332
  %v365 = vunpack.c.l.b16 %v333
  %v366 = vunpack.c.l.b16 %v334
  %v367 = vunpack.c.l.b16 %v335
  %v368 = vunpack.c.l.b16 %v336
  %v369 = vpack.c.b16 %v354, %v353
  %v370 = vpack.c.b16 %v356, %v355
  %v371 = vpack.c.b16 %v358, %v357
  %v372 = vpack.c.b16 %v360, %v359
  %v373 = vpack.c.b16 %v362, %v361
  %v374 = vpack.c.b16 %v364, %v363
  %v375 = vpack.c.b16 %v366, %v365
  %v376 = vpack.c.b16 %v368, %v367
  %385 = vmatprep.subr.bf16.mxu0 0
  %386 = vmatpush1.bf16.msra.mxu0 %v369
  %387 = vmatprep.subr.bf16.mxu0 0
  %388 = vmatpush1.bf16.msra.mxu0 %v370
  %389 = vmatprep.subr.bf16.mxu0 0
  %390 = vmatpush1.bf16.msra.mxu0 %v371
  %391 = vmatprep.subr.bf16.mxu0 0
  %392 = vmatpush1.bf16.msra.mxu0 %v372
  %393 = vmatprep.subr.bf16.mxu0 0
  %394 = vmatpush1.bf16.msra.mxu0 %v373
  %395 = vmatprep.subr.bf16.mxu0 0
  %396 = vmatpush1.bf16.msra.mxu0 %v374
  %397 = vmatprep.subr.bf16.mxu0 0
  %398 = vmatpush1.bf16.msra.mxu0 %v375
  %399 = vmatprep.subr.bf16.mxu0 0
  %400 = vmatpush1.bf16.msra.mxu0 %v376
  %401 = vmatprep.subr.bf16.mxu0 0
  %402 = vmatpush1.bf16.msra.mxu0 0
  %403 = vmatprep.subr.bf16.mxu0 0
  %404 = vmatpush1.bf16.msra.mxu0 0
  %405 = vmatprep.subr.bf16.mxu0 0
  %406 = vmatpush1.bf16.msra.mxu0 0
  %407 = vmatprep.subr.bf16.mxu0 0
  %408 = vmatpush1.bf16.msra.mxu0 0
  %409 = vmatprep.subr.bf16.mxu0 0
  %410 = vmatpush1.bf16.msra.mxu0 0
  %411 = vmatprep.subr.bf16.mxu0 0
  %412 = vmatpush1.bf16.msra.mxu0 0
  %413 = vmatprep.subr.bf16.mxu0 0
  %414 = vmatpush1.bf16.msra.mxu0 0
  %415 = vmatprep.subr.bf16.mxu0 0
  %416 = vmatpush1.bf16.msra.mxu0 0
  %417 = vmatprep.mubr.bf16.mxu0 0
  %418 = vmatmul.mubr.bf16.gmra.mrb[0].mxu0 %v315
  %v419 = vpop.f32.mrb[0].mxu0
  %v420 = vadd.f32 0.0, %v419
  %v421 = vpop.f32.mrb[0].mxu0
  %v422 = vpop.f32.mrb[0].mxu0
  %v423 = vpop.f32.mrb[0].mxu0
  %424 = vdwg.mxu0
  %v425 = vadd.f32 %v320, %v420
  %v426 = vxor.u32 %v425, 2147483648
  %v427 = vmul.f32 %v426, 1.442695
  %v428 = vpow.pop %v427
  %v429 = vadd.f32 %v428, 1.0
  %v430 = vrcp.pop %v429
  %v431 = vmul.f32 1.0, %v430
  %v432 = vtanh.pop %v425
  %434 = vrot.lane.b32.xlu0 %v309, 32
  %v435 = vpop.permute.xlu0 %434
  %v437 = vmul.f32 %v431, %v435
  %439 = vrot.lane.b32.xlu0 %v432, 64
  %v440 = vpop.permute.xlu0 %439
  %v442 = vmul.f32 %v431, %v440
  %444 = vrot.lane.b32.xlu0 %v442, 32
  %v445 = vpop.permute.xlu0 %444
  %v447 = vadd.f32 %v437, %v445
  %v448 = vtanh.pop %v447
  %450 = vrot.lane.b32.xlu0 %v448, 64
  %v451 = vpop.permute.xlu0 %450
  %v453 = vmul.f32 %v431, %v451
  %455 = vrot.lane.b32.xlu0 %v447, 96
  %v456 = vpop.permute.xlu0 %455
  %v458 = vsel %vm160, %v456, 0.0
  %460 = vrot.lane.b32.xlu0 %v453, 32
  %v461 = vpop.permute.xlu0 %460
  %v463 = vsel %vm160, %v461, 0.0
  %v464 = vpack.c.bf16 %v463, %v463
  %s465 = scalar_lea.vmem %s2, 8
  %466 = vst [vmem:[%s465] sm:$0xf] %v464
  %s467 = scalar_lea.vmem %s0, 12
  %v468 = vld [vmem:[%s467] sm:$0xf]
  %v469 = vunpack.c.l.bf16 %v468
  %v470 = vld [vmem:[%s1] sm:$0xf]
  %v471 = vld [vmem:[%s1 + $0x4] sm:$0xf]
  %v472 = vld [vmem:[%s1 + $0x8] sm:$0xf]
  %v473 = vld [vmem:[%s1 + $0xc] sm:$0xf]
  %v474 = vld [vmem:[%s1 + $0x10] sm:$0xf]
  %v475 = vld [vmem:[%s1 + $0x14] sm:$0xf]
  %v476 = vld [vmem:[%s1 + $0x18] sm:$0xf]
  %v477 = vld [vmem:[%s1 + $0x1c] sm:$0xf]
  %v478 = vld [vmem:[%s1 + $0x20] sm:$0xf]
  %v479 = vld [vmem:[%s1 + $0x24] sm:$0xf]
  %v480 = vld [vmem:[%s1 + $0x28] sm:$0xf]
  %v481 = vld [vmem:[%s1 + $0x2c] sm:$0xf]
  %v482 = vld [vmem:[%s1 + $0x30] sm:$0xf]
  %v483 = vld [vmem:[%s1 + $0x34] sm:$0xf]
  %v484 = vld [vmem:[%s1 + $0x38] sm:$0xf]
  %v485 = vld [vmem:[%s1 + $0x3c] sm:$0xf]
  %v502 = vunpack.c.l.b16 %v470
  %v503 = vunpack.c.l.b16 %v471
  %v504 = vunpack.c.l.b16 %v472
  %v505 = vunpack.c.l.b16 %v473
  %v506 = vunpack.c.l.b16 %v474
  %v507 = vunpack.c.l.b16 %v475
  %v508 = vunpack.c.l.b16 %v476
  %v509 = vunpack.c.l.b16 %v477
  %v510 = vunpack.c.l.b16 %v478
  %v511 = vunpack.c.l.b16 %v479
  %v512 = vunpack.c.l.b16 %v480
  %v513 = vunpack.c.l.b16 %v481
  %v514 = vunpack.c.l.b16 %v482
  %v515 = vunpack.c.l.b16 %v483
  %v516 = vunpack.c.l.b16 %v484
  %v517 = vunpack.c.l.b16 %v485
  %v518 = vpack.c.b16 %v503, %v502
  %v519 = vpack.c.b16 %v505, %v504
  %v520 = vpack.c.b16 %v507, %v506
  %v521 = vpack.c.b16 %v509, %v508
  %v522 = vpack.c.b16 %v511, %v510
  %v523 = vpack.c.b16 %v513, %v512
  %v524 = vpack.c.b16 %v515, %v514
  %v525 = vpack.c.b16 %v517, %v516
  %534 = vmatprep.subr.bf16.mxu0 0
  %535 = vmatpush1.bf16.msra.mxu0 %v518
  %536 = vmatprep.subr.bf16.mxu0 0
  %537 = vmatpush1.bf16.msra.mxu0 %v519
  %538 = vmatprep.subr.bf16.mxu0 0
  %539 = vmatpush1.bf16.msra.mxu0 %v520
  %540 = vmatprep.subr.bf16.mxu0 0
  %541 = vmatpush1.bf16.msra.mxu0 %v521
  %542 = vmatprep.subr.bf16.mxu0 0
  %543 = vmatpush1.bf16.msra.mxu0 %v522
  %544 = vmatprep.subr.bf16.mxu0 0
  %545 = vmatpush1.bf16.msra.mxu0 %v523
  %546 = vmatprep.subr.bf16.mxu0 0
  %547 = vmatpush1.bf16.msra.mxu0 %v524
  %548 = vmatprep.subr.bf16.mxu0 0
  %549 = vmatpush1.bf16.msra.mxu0 %v525
  %550 = vmatprep.subr.bf16.mxu0 0
  %551 = vmatpush1.bf16.msra.mxu0 0
  %552 = vmatprep.subr.bf16.mxu0 0
  %553 = vmatpush1.bf16.msra.mxu0 0
  %554 = vmatprep.subr.bf16.mxu0 0
  %555 = vmatpush1.bf16.msra.mxu0 0
  %556 = vmatprep.subr.bf16.mxu0 0
  %557 = vmatpush1.bf16.msra.mxu0 0
  %558 = vmatprep.subr.bf16.mxu0 0
  %559 = vmatpush1.bf16.msra.mxu0 0
  %560 = vmatprep.subr.bf16.mxu0 0
  %561 = vmatpush1.bf16.msra.mxu0 0
  %562 = vmatprep.subr.bf16.mxu0 0
  %563 = vmatpush1.bf16.msra.mxu0 0
  %564 = vmatprep.subr.bf16.mxu0 0
  %565 = vmatpush1.bf16.msra.mxu0 0
  %566 = vmatprep.mubr.bf16.mxu0 0
  %567 = vmatmul.mubr.bf16.gmra.mrb[0].mxu0 %v464
  %v568 = vpop.f32.mrb[0].mxu0
  %v569 = vadd.f32 0.0, %v568
  %v570 = vpop.f32.mrb[0].mxu0
  %v571 = vpop.f32.mrb[0].mxu0
  %v572 = vpop.f32.mrb[0].mxu0
  %573 = vdwg.mxu0
  %v574 = vadd.f32 %v469, %v569
  %v575 = vxor.u32 %v574, 2147483648
  %v576 = vmul.f32 %v575, 1.442695
  %v577 = vpow.pop %v576
  %v578 = vadd.f32 %v577, 1.0
  %v579 = vrcp.pop %v578
  %v580 = vmul.f32 1.0, %v579
  %v581 = vtanh.pop %v574
  %583 = vrot.lane.b32.xlu0 %v458, 32
  %v584 = vpop.permute.xlu0 %583
  %v586 = vmul.f32 %v580, %v584
  %588 = vrot.lane.b32.xlu0 %v581, 64
  %v589 = vpop.permute.xlu0 %588
  %v591 = vmul.f32 %v580, %v589
  %593 = vrot.lane.b32.xlu0 %v591, 32
  %v594 = vpop.permute.xlu0 %593
  %v596 = vadd.f32 %v586, %v594
  %v597 = vtanh.pop %v596
  %599 = vrot.lane.b32.xlu0 %v597, 64
  %v600 = vpop.permute.xlu0 %599
  %v602 = vmul.f32 %v580, %v600
  %604 = vrot.lane.b32.xlu0 %v596, 96
  %v605 = vpop.permute.xlu0 %604
  %v607 = vsel %vm160, %v605, 0.0
  %609 = vrot.lane.b32.xlu0 %v602, 32
  %v610 = vpop.permute.xlu0 %609
  %v612 = vsel %vm160, %v610, 0.0
  %v613 = vpack.c.bf16 %v612, %v612
  %s614 = scalar_lea.vmem %s2, 12
  %615 = vst [vmem:[%s614] sm:$0xf] %v613
  %s616 = scalar_lea.vmem %s0, 16
  %v617 = vld [vmem:[%s616] sm:$0xf]
  %v618 = vunpack.c.l.bf16 %v617
  %v619 = vld [vmem:[%s1] sm:$0xf]
  %v620 = vld [vmem:[%s1 + $0x4] sm:$0xf]
  %v621 = vld [vmem:[%s1 + $0x8] sm:$0xf]
  %v622 = vld [vmem:[%s1 + $0xc] sm:$0xf]
  %v623 = vld [vmem:[%s1 + $0x10] sm:$0xf]
  %v624 = vld [vmem:[%s1 + $0x14] sm:$0xf]
  %v625 = vld [vmem:[%s1 + $0x18] sm:$0xf]
  %v626 = vld [vmem:[%s1 + $0x1c] sm:$0xf]
  %v627 = vld [vmem:[%s1 + $0x20] sm:$0xf]
  %v628 = vld [vmem:[%s1 + $0x24] sm:$0xf]
  %v629 = vld [vmem:[%s1 + $0x28] sm:$0xf]
  %v630 = vld [vmem:[%s1 + $0x2c] sm:$0xf]
  %v631 = vld [vmem:[%s1 + $0x30] sm:$0xf]
  %v632 = vld [vmem:[%s1 + $0x34] sm:$0xf]
  %v633 = vld [vmem:[%s1 + $0x38] sm:$0xf]
  %v634 = vld [vmem:[%s1 + $0x3c] sm:$0xf]
  %v651 = vunpack.c.l.b16 %v619
  %v652 = vunpack.c.l.b16 %v620
  %v653 = vunpack.c.l.b16 %v621
  %v654 = vunpack.c.l.b16 %v622
  %v655 = vunpack.c.l.b16 %v623
  %v656 = vunpack.c.l.b16 %v624
  %v657 = vunpack.c.l.b16 %v625
  %v658 = vunpack.c.l.b16 %v626
  %v659 = vunpack.c.l.b16 %v627
  %v660 = vunpack.c.l.b16 %v628
  %v661 = vunpack.c.l.b16 %v629
  %v662 = vunpack.c.l.b16 %v630
  %v663 = vunpack.c.l.b16 %v631
  %v664 = vunpack.c.l.b16 %v632
  %v665 = vunpack.c.l.b16 %v633
  %v666 = vunpack.c.l.b16 %v634
  %v667 = vpack.c.b16 %v652, %v651
  %v668 = vpack.c.b16 %v654, %v653
  %v669 = vpack.c.b16 %v656, %v655
  %v670 = vpack.c.b16 %v658, %v657
  %v671 = vpack.c.b16 %v660, %v659
  %v672 = vpack.c.b16 %v662, %v661
  %v673 = vpack.c.b16 %v664, %v663
  %v674 = vpack.c.b16 %v666, %v665
  %683 = vmatprep.subr.bf16.mxu0 0
  %684 = vmatpush1.bf16.msra.mxu0 %v667
  %685 = vmatprep.subr.bf16.mxu0 0
  %686 = vmatpush1.bf16.msra.mxu0 %v668
  %687 = vmatprep.subr.bf16.mxu0 0
  %688 = vmatpush1.bf16.msra.mxu0 %v669
  %689 = vmatprep.subr.bf16.mxu0 0
  %690 = vmatpush1.bf16.msra.mxu0 %v670
  %691 = vmatprep.subr.bf16.mxu0 0
  %692 = vmatpush1.bf16.msra.mxu0 %v671
  %693 = vmatprep.subr.bf16.mxu0 0
  %694 = vmatpush1.bf16.msra.mxu0 %v672
  %695 = vmatprep.subr.bf16.mxu0 0
  %696 = vmatpush1.bf16.msra.mxu0 %v673
  %697 = vmatprep.subr.bf16.mxu0 0
  %698 = vmatpush1.bf16.msra.mxu0 %v674
  %699 = vmatprep.subr.bf16.mxu0 0
  %700 = vmatpush1.bf16.msra.mxu0 0
  %701 = vmatprep.subr.bf16.mxu0 0
  %702 = vmatpush1.bf16.msra.mxu0 0
  %703 = vmatprep.subr.bf16.mxu0 0
  %704 = vmatpush1.bf16.msra.mxu0 0
  %705 = vmatprep.subr.bf16.mxu0 0
  %706 = vmatpush1.bf16.msra.mxu0 0
  %707 = vmatprep.subr.bf16.mxu0 0
  %708 = vmatpush1.bf16.msra.mxu0 0
  %709 = vmatprep.subr.bf16.mxu0 0
  %710 = vmatpush1.bf16.msra.mxu0 0
  %711 = vmatprep.subr.bf16.mxu0 0
  %712 = vmatpush1.bf16.msra.mxu0 0
  %713 = vmatprep.subr.bf16.mxu0 0
  %714 = vmatpush1.bf16.msra.mxu0 0
  %715 = vmatprep.mubr.bf16.mxu0 0
  %716 = vmatmul.mubr.bf16.gmra.mrb[0].mxu0 %v613
  %v717 = vpop.f32.mrb[0].mxu0
  %v718 = vadd.f32 0.0, %v717
  %v719 = vpop.f32.mrb[0].mxu0
  %v720 = vpop.f32.mrb[0].mxu0
  %v721 = vpop.f32.mrb[0].mxu0
  %722 = vdwg.mxu0
  %v723 = vadd.f32 %v618, %v718
  %v724 = vxor.u32 %v723, 2147483648
  %v725 = vmul.f32 %v724, 1.442695
  %v726 = vpow.pop %v725
  %v727 = vadd.f32 %v726, 1.0
  %v728 = vrcp.pop %v727
  %v729 = vmul.f32 1.0, %v728
  %v730 = vtanh.pop %v723
  %732 = vrot.lane.b32.xlu0 %v607, 32
  %v733 = vpop.permute.xlu0 %732
  %v735 = vmul.f32 %v729, %v733
  %737 = vrot.lane.b32.xlu0 %v730, 64
  %v738 = vpop.permute.xlu0 %737
  %v740 = vmul.f32 %v729, %v738
  %742 = vrot.lane.b32.xlu0 %v740, 32
  %v743 = vpop.permute.xlu0 %742
  %v745 = vadd.f32 %v735, %v743
  %v746 = vtanh.pop %v745
  %748 = vrot.lane.b32.xlu0 %v746, 64
  %v749 = vpop.permute.xlu0 %748
  %v751 = vmul.f32 %v729, %v749
  %753 = vrot.lane.b32.xlu0 %v745, 96
  %v754 = vpop.permute.xlu0 %753
  %v756 = vsel %vm160, %v754, 0.0
  %758 = vrot.lane.b32.xlu0 %v751, 32
  %v759 = vpop.permute.xlu0 %758
  %v761 = vsel %vm160, %v759, 0.0
  %v762 = vpack.c.bf16 %v761, %v761
  %s763 = scalar_lea.vmem %s2, 16
  %764 = vst [vmem:[%s763] sm:$0xf] %v762
  %s765 = scalar_lea.vmem %s0, 20
  %v766 = vld [vmem:[%s765] sm:$0xf]
  %v767 = vunpack.c.l.bf16 %v766
  %v768 = vld [vmem:[%s1] sm:$0xf]
  %v769 = vld [vmem:[%s1 + $0x4] sm:$0xf]
  %v770 = vld [vmem:[%s1 + $0x8] sm:$0xf]
  %v771 = vld [vmem:[%s1 + $0xc] sm:$0xf]
  %v772 = vld [vmem:[%s1 + $0x10] sm:$0xf]
  %v773 = vld [vmem:[%s1 + $0x14] sm:$0xf]
  %v774 = vld [vmem:[%s1 + $0x18] sm:$0xf]
  %v775 = vld [vmem:[%s1 + $0x1c] sm:$0xf]
  %v776 = vld [vmem:[%s1 + $0x20] sm:$0xf]
  %v777 = vld [vmem:[%s1 + $0x24] sm:$0xf]
  %v778 = vld [vmem:[%s1 + $0x28] sm:$0xf]
  %v779 = vld [vmem:[%s1 + $0x2c] sm:$0xf]
  %v780 = vld [vmem:[%s1 + $0x30] sm:$0xf]
  %v781 = vld [vmem:[%s1 + $0x34] sm:$0xf]
  %v782 = vld [vmem:[%s1 + $0x38] sm:$0xf]
  %v783 = vld [vmem:[%s1 + $0x3c] sm:$0xf]
  %v800 = vunpack.c.l.b16 %v768
  %v801 = vunpack.c.l.b16 %v769
  %v802 = vunpack.c.l.b16 %v770
  %v803 = vunpack.c.l.b16 %v771
  %v804 = vunpack.c.l.b16 %v772
  %v805 = vunpack.c.l.b16 %v773
  %v806 = vunpack.c.l.b16 %v774
  %v807 = vunpack.c.l.b16 %v775
  %v808 = vunpack.c.l.b16 %v776
  %v809 = vunpack.c.l.b16 %v777
  %v810 = vunpack.c.l.b16 %v778
  %v811 = vunpack.c.l.b16 %v779
  %v812 = vunpack.c.l.b16 %v780
  %v813 = vunpack.c.l.b16 %v781
  %v814 = vunpack.c.l.b16 %v782
  %v815 = vunpack.c.l.b16 %v783
  %v816 = vpack.c.b16 %v801, %v800
  %v817 = vpack.c.b16 %v803, %v802
  %v818 = vpack.c.b16 %v805, %v804
  %v819 = vpack.c.b16 %v807, %v806
  %v820 = vpack.c.b16 %v809, %v808
  %v821 = vpack.c.b16 %v811, %v810
  %v822 = vpack.c.b16 %v813, %v812
  %v823 = vpack.c.b16 %v815, %v814
  %832 = vmatprep.subr.bf16.mxu0 0
  %833 = vmatpush1.bf16.msra.mxu0 %v816
  %834 = vmatprep.subr.bf16.mxu0 0
  %835 = vmatpush1.bf16.msra.mxu0 %v817
  %836 = vmatprep.subr.bf16.mxu0 0
  %837 = vmatpush1.bf16.msra.mxu0 %v818
  %838 = vmatprep.subr.bf16.mxu0 0
  %839 = vmatpush1.bf16.msra.mxu0 %v819
  %840 = vmatprep.subr.bf16.mxu0 0
  %841 = vmatpush1.bf16.msra.mxu0 %v820
  %842 = vmatprep.subr.bf16.mxu0 0
  %843 = vmatpush1.bf16.msra.mxu0 %v821
  %844 = vmatprep.subr.bf16.mxu0 0
  %845 = vmatpush1.bf16.msra.mxu0 %v822
  %846 = vmatprep.subr.bf16.mxu0 0
  %847 = vmatpush1.bf16.msra.mxu0 %v823
  %848 = vmatprep.subr.bf16.mxu0 0
  %849 = vmatpush1.bf16.msra.mxu0 0
  %850 = vmatprep.subr.bf16.mxu0 0
  %851 = vmatpush1.bf16.msra.mxu0 0
  %852 = vmatprep.subr.bf16.mxu0 0
  %853 = vmatpush1.bf16.msra.mxu0 0
  %854 = vmatprep.subr.bf16.mxu0 0
  %855 = vmatpush1.bf16.msra.mxu0 0
  %856 = vmatprep.subr.bf16.mxu0 0
  %857 = vmatpush1.bf16.msra.mxu0 0
  %858 = vmatprep.subr.bf16.mxu0 0
  %859 = vmatpush1.bf16.msra.mxu0 0
  %860 = vmatprep.subr.bf16.mxu0 0
  %861 = vmatpush1.bf16.msra.mxu0 0
  %862 = vmatprep.subr.bf16.mxu0 0
  %863 = vmatpush1.bf16.msra.mxu0 0
  %864 = vmatprep.mubr.bf16.mxu0 0
  %865 = vmatmul.mubr.bf16.gmra.mrb[0].mxu0 %v762
  %v866 = vpop.f32.mrb[0].mxu0
  %v867 = vadd.f32 0.0, %v866
  %v868 = vpop.f32.mrb[0].mxu0
  %v869 = vpop.f32.mrb[0].mxu0
  %v870 = vpop.f32.mrb[0].mxu0
  %871 = vdwg.mxu0
  %v872 = vadd.f32 %v767, %v867
  %v873 = vxor.u32 %v872, 2147483648
  %v874 = vmul.f32 %v873, 1.442695
  %v875 = vpow.pop %v874
  %v876 = vadd.f32 %v875, 1.0
  %v877 = vrcp.pop %v876
  %v878 = vmul.f32 1.0, %v877
  %v879 = vtanh.pop %v872
  %881 = vrot.lane.b32.xlu0 %v756, 32
  %v882 = vpop.permute.xlu0 %881
  %v884 = vmul.f32 %v878, %v882
  %886 = vrot.lane.b32.xlu0 %v879, 64
  %v887 = vpop.permute.xlu0 %886
  %v889 = vmul.f32 %v878, %v887
  %891 = vrot.lane.b32.xlu0 %v889, 32
  %v892 = vpop.permute.xlu0 %891
  %v894 = vadd.f32 %v884, %v892
  %v895 = vtanh.pop %v894
  %897 = vrot.lane.b32.xlu0 %v895, 64
  %v898 = vpop.permute.xlu0 %897
  %v900 = vmul.f32 %v878, %v898
  %902 = vrot.lane.b32.xlu0 %v894, 96
  %v903 = vpop.permute.xlu0 %902
  %v905 = vsel %vm160, %v903, 0.0
  %907 = vrot.lane.b32.xlu0 %v900, 32
  %v908 = vpop.permute.xlu0 %907
  %v910 = vsel %vm160, %v908, 0.0
  %v911 = vpack.c.bf16 %v910, %v910
  %s912 = scalar_lea.vmem %s2, 20
  %913 = vst [vmem:[%s912] sm:$0xf] %v911
  %s914 = scalar_lea.vmem %s0, 24
  %v915 = vld [vmem:[%s914] sm:$0xf]
  %v916 = vunpack.c.l.bf16 %v915
  %v917 = vld [vmem:[%s1] sm:$0xf]
  %v918 = vld [vmem:[%s1 + $0x4] sm:$0xf]
  %v919 = vld [vmem:[%s1 + $0x8] sm:$0xf]
  %v920 = vld [vmem:[%s1 + $0xc] sm:$0xf]
  %v921 = vld [vmem:[%s1 + $0x10] sm:$0xf]
  %v922 = vld [vmem:[%s1 + $0x14] sm:$0xf]
  %v923 = vld [vmem:[%s1 + $0x18] sm:$0xf]
  %v924 = vld [vmem:[%s1 + $0x1c] sm:$0xf]
  %v925 = vld [vmem:[%s1 + $0x20] sm:$0xf]
  %v926 = vld [vmem:[%s1 + $0x24] sm:$0xf]
  %v927 = vld [vmem:[%s1 + $0x28] sm:$0xf]
  %v928 = vld [vmem:[%s1 + $0x2c] sm:$0xf]
  %v929 = vld [vmem:[%s1 + $0x30] sm:$0xf]
  %v930 = vld [vmem:[%s1 + $0x34] sm:$0xf]
  %v931 = vld [vmem:[%s1 + $0x38] sm:$0xf]
  %v932 = vld [vmem:[%s1 + $0x3c] sm:$0xf]
  %v949 = vunpack.c.l.b16 %v917
  %v950 = vunpack.c.l.b16 %v918
  %v951 = vunpack.c.l.b16 %v919
  %v952 = vunpack.c.l.b16 %v920
  %v953 = vunpack.c.l.b16 %v921
  %v954 = vunpack.c.l.b16 %v922
  %v955 = vunpack.c.l.b16 %v923
  %v956 = vunpack.c.l.b16 %v924
  %v957 = vunpack.c.l.b16 %v925
  %v958 = vunpack.c.l.b16 %v926
  %v959 = vunpack.c.l.b16 %v927
  %v960 = vunpack.c.l.b16 %v928
  %v961 = vunpack.c.l.b16 %v929
  %v962 = vunpack.c.l.b16 %v930
  %v963 = vunpack.c.l.b16 %v931
  %v964 = vunpack.c.l.b16 %v932
  %v965 = vpack.c.b16 %v950, %v949
  %v966 = vpack.c.b16 %v952, %v951
  %v967 = vpack.c.b16 %v954, %v953
  %v968 = vpack.c.b16 %v956, %v955
  %v969 = vpack.c.b16 %v958, %v957
  %v970 = vpack.c.b16 %v960, %v959
  %v971 = vpack.c.b16 %v962, %v961
  %v972 = vpack.c.b16 %v964, %v963
  %981 = vmatprep.subr.bf16.mxu0 0
  %982 = vmatpush1.bf16.msra.mxu0 %v965
  %983 = vmatprep.subr.bf16.mxu0 0
  %984 = vmatpush1.bf16.msra.mxu0 %v966
  %985 = vmatprep.subr.bf16.mxu0 0
  %986 = vmatpush1.bf16.msra.mxu0 %v967
  %987 = vmatprep.subr.bf16.mxu0 0
  %988 = vmatpush1.bf16.msra.mxu0 %v968
  %989 = vmatprep.subr.bf16.mxu0 0
  %990 = vmatpush1.bf16.msra.mxu0 %v969
  %991 = vmatprep.subr.bf16.mxu0 0
  %992 = vmatpush1.bf16.msra.mxu0 %v970
  %993 = vmatprep.subr.bf16.mxu0 0
  %994 = vmatpush1.bf16.msra.mxu0 %v971
  %995 = vmatprep.subr.bf16.mxu0 0
  %996 = vmatpush1.bf16.msra.mxu0 %v972
  %997 = vmatprep.subr.bf16.mxu0 0
  %998 = vmatpush1.bf16.msra.mxu0 0
  %999 = vmatprep.subr.bf16.mxu0 0
  %1000 = vmatpush1.bf16.msra.mxu0 0
  %1001 = vmatprep.subr.bf16.mxu0 0
  %1002 = vmatpush1.bf16.msra.mxu0 0
  %1003 = vmatprep.subr.bf16.mxu0 0
  %1004 = vmatpush1.bf16.msra.mxu0 0
  %1005 = vmatprep.subr.bf16.mxu0 0
  %1006 = vmatpush1.bf16.msra.mxu0 0
  %1007 = vmatprep.subr.bf16.mxu0 0
  %1008 = vmatpush1.bf16.msra.mxu0 0
  %1009 = vmatprep.subr.bf16.mxu0 0
  %1010 = vmatpush1.bf16.msra.mxu0 0
  %1011 = vmatprep.subr.bf16.mxu0 0
  %1012 = vmatpush1.bf16.msra.mxu0 0
  %1013 = vmatprep.mubr.bf16.mxu0 0
  %1014 = vmatmul.mubr.bf16.gmra.mrb[0].mxu0 %v911
  %v1015 = vpop.f32.mrb[0].mxu0
  %v1016 = vadd.f32 0.0, %v1015
  %v1017 = vpop.f32.mrb[0].mxu0
  %v1018 = vpop.f32.mrb[0].mxu0
  %v1019 = vpop.f32.mrb[0].mxu0
  %1020 = vdwg.mxu0
  %v1021 = vadd.f32 %v916, %v1016
  %v1022 = vxor.u32 %v1021, 2147483648
  %v1023 = vmul.f32 %v1022, 1.442695
  %v1024 = vpow.pop %v1023
  %v1025 = vadd.f32 %v1024, 1.0
  %v1026 = vrcp.pop %v1025
  %v1027 = vmul.f32 1.0, %v1026
  %v1028 = vtanh.pop %v1021
  %1030 = vrot.lane.b32.xlu0 %v905, 32
  %v1031 = vpop.permute.xlu0 %1030
  %v1033 = vmul.f32 %v1027, %v1031
  %1035 = vrot.lane.b32.xlu0 %v1028, 64
  %v1036 = vpop.permute.xlu0 %1035
  %v1038 = vmul.f32 %v1027, %v1036
  %1040 = vrot.lane.b32.xlu0 %v1038, 32
  %v1041 = vpop.permute.xlu0 %1040
  %v1043 = vadd.f32 %v1033, %v1041
  %v1044 = vtanh.pop %v1043
  %1046 = vrot.lane.b32.xlu0 %v1044, 64
  %v1047 = vpop.permute.xlu0 %1046
  %v1049 = vmul.f32 %v1027, %v1047
  %1051 = vrot.lane.b32.xlu0 %v1043, 96
  %v1052 = vpop.permute.xlu0 %1051
  %v1054 = vsel %vm160, %v1052, 0.0
  %1056 = vrot.lane.b32.xlu0 %v1049, 32
  %v1057 = vpop.permute.xlu0 %1056
  %v1059 = vsel %vm160, %v1057, 0.0
  %v1060 = vpack.c.bf16 %v1059, %v1059
  %s1061 = scalar_lea.vmem %s2, 24
  %1062 = vst [vmem:[%s1061] sm:$0xf] %v1060
  %s1063 = scalar_lea.vmem %s0, 28
  %v1064 = vld [vmem:[%s1063] sm:$0xf]
  %v1065 = vunpack.c.l.bf16 %v1064
  %v1066 = vld [vmem:[%s1] sm:$0xf]
  %v1067 = vld [vmem:[%s1 + $0x4] sm:$0xf]
  %v1068 = vld [vmem:[%s1 + $0x8] sm:$0xf]
  %v1069 = vld [vmem:[%s1 + $0xc] sm:$0xf]
  %v1070 = vld [vmem:[%s1 + $0x10] sm:$0xf]
  %v1071 = vld [vmem:[%s1 + $0x14] sm:$0xf]
  %v1072 = vld [vmem:[%s1 + $0x18] sm:$0xf]
  %v1073 = vld [vmem:[%s1 + $0x1c] sm:$0xf]
  %v1074 = vld [vmem:[%s1 + $0x20] sm:$0xf]
  %v1075 = vld [vmem:[%s1 + $0x24] sm:$0xf]
  %v1076 = vld [vmem:[%s1 + $0x28] sm:$0xf]
  %v1077 = vld [vmem:[%s1 + $0x2c] sm:$0xf]
  %v1078 = vld [vmem:[%s1 + $0x30] sm:$0xf]
  %v1079 = vld [vmem:[%s1 + $0x34] sm:$0xf]
  %v1080 = vld [vmem:[%s1 + $0x38] sm:$0xf]
  %v1081 = vld [vmem:[%s1 + $0x3c] sm:$0xf]
  %v1098 = vunpack.c.l.b16 %v1066
  %v1099 = vunpack.c.l.b16 %v1067
  %v1100 = vunpack.c.l.b16 %v1068
  %v1101 = vunpack.c.l.b16 %v1069
  %v1102 = vunpack.c.l.b16 %v1070
  %v1103 = vunpack.c.l.b16 %v1071
  %v1104 = vunpack.c.l.b16 %v1072
  %v1105 = vunpack.c.l.b16 %v1073
  %v1106 = vunpack.c.l.b16 %v1074
  %v1107 = vunpack.c.l.b16 %v1075
  %v1108 = vunpack.c.l.b16 %v1076
  %v1109 = vunpack.c.l.b16 %v1077
  %v1110 = vunpack.c.l.b16 %v1078
  %v1111 = vunpack.c.l.b16 %v1079
  %v1112 = vunpack.c.l.b16 %v1080
  %v1113 = vunpack.c.l.b16 %v1081
  %v1114 = vpack.c.b16 %v1099, %v1098
  %v1115 = vpack.c.b16 %v1101, %v1100
  %v1116 = vpack.c.b16 %v1103, %v1102
  %v1117 = vpack.c.b16 %v1105, %v1104
  %v1118 = vpack.c.b16 %v1107, %v1106
  %v1119 = vpack.c.b16 %v1109, %v1108
  %v1120 = vpack.c.b16 %v1111, %v1110
  %v1121 = vpack.c.b16 %v1113, %v1112
  %1130 = vmatprep.subr.bf16.mxu0 0
  %1131 = vmatpush1.bf16.msra.mxu0 %v1114
  %1132 = vmatprep.subr.bf16.mxu0 0
  %1133 = vmatpush1.bf16.msra.mxu0 %v1115
  %1134 = vmatprep.subr.bf16.mxu0 0
  %1135 = vmatpush1.bf16.msra.mxu0 %v1116
  %1136 = vmatprep.subr.bf16.mxu0 0
  %1137 = vmatpush1.bf16.msra.mxu0 %v1117
  %1138 = vmatprep.subr.bf16.mxu0 0
  %1139 = vmatpush1.bf16.msra.mxu0 %v1118
  %1140 = vmatprep.subr.bf16.mxu0 0
  %1141 = vmatpush1.bf16.msra.mxu0 %v1119
  %1142 = vmatprep.subr.bf16.mxu0 0
  %1143 = vmatpush1.bf16.msra.mxu0 %v1120
  %1144 = vmatprep.subr.bf16.mxu0 0
  %1145 = vmatpush1.bf16.msra.mxu0 %v1121
  %1146 = vmatprep.subr.bf16.mxu0 0
  %1147 = vmatpush1.bf16.msra.mxu0 0
  %1148 = vmatprep.subr.bf16.mxu0 0
  %1149 = vmatpush1.bf16.msra.mxu0 0
  %1150 = vmatprep.subr.bf16.mxu0 0
  %1151 = vmatpush1.bf16.msra.mxu0 0
  %1152 = vmatprep.subr.bf16.mxu0 0
  %1153 = vmatpush1.bf16.msra.mxu0 0
  %1154 = vmatprep.subr.bf16.mxu0 0
  %1155 = vmatpush1.bf16.msra.mxu0 0
  %1156 = vmatprep.subr.bf16.mxu0 0
  %1157 = vmatpush1.bf16.msra.mxu0 0
  %1158 = vmatprep.subr.bf16.mxu0 0
  %1159 = vmatpush1.bf16.msra.mxu0 0
  %1160 = vmatprep.subr.bf16.mxu0 0
  %1161 = vmatpush1.bf16.msra.mxu0 0
  %1162 = vmatprep.mubr.bf16.mxu0 0
  %1163 = vmatmul.mubr.bf16.gmra.mrb[0].mxu0 %v1060
  %v1164 = vpop.f32.mrb[0].mxu0
  %v1165 = vadd.f32 0.0, %v1164
  %v1166 = vpop.f32.mrb[0].mxu0
  %v1167 = vpop.f32.mrb[0].mxu0
  %v1168 = vpop.f32.mrb[0].mxu0
  %1169 = vdwg.mxu0
  %v1170 = vadd.f32 %v1065, %v1165
  %v1171 = vxor.u32 %v1170, 2147483648
  %v1172 = vmul.f32 %v1171, 1.442695
  %v1173 = vpow.pop %v1172
  %v1174 = vadd.f32 %v1173, 1.0
  %v1175 = vrcp.pop %v1174
  %v1176 = vmul.f32 1.0, %v1175
  %v1177 = vtanh.pop %v1170
  %1179 = vrot.lane.b32.xlu0 %v1054, 32
  %v1180 = vpop.permute.xlu0 %1179
  %v1182 = vmul.f32 %v1176, %v1180
  %1184 = vrot.lane.b32.xlu0 %v1177, 64
  %v1185 = vpop.permute.xlu0 %1184
  %v1187 = vmul.f32 %v1176, %v1185
  %1189 = vrot.lane.b32.xlu0 %v1187, 32
  %v1190 = vpop.permute.xlu0 %1189
  %v1192 = vadd.f32 %v1182, %v1190
  %v1193 = vtanh.pop %v1192
  %1195 = vrot.lane.b32.xlu0 %v1193, 64
  %v1196 = vpop.permute.xlu0 %1195
  %v1198 = vmul.f32 %v1176, %v1196
  %1200 = vrot.lane.b32.xlu0 %v1192, 96
  %v1201 = vpop.permute.xlu0 %1200
  %v1203 = vsel %vm160, %v1201, 0.0
  %1205 = vrot.lane.b32.xlu0 %v1198, 32
  %v1206 = vpop.permute.xlu0 %1205
  %v1208 = vsel %vm160, %v1206, 0.0
  %v1209 = vpack.c.bf16 %v1208, %v1208
  %s1210 = scalar_lea.vmem %s2, 28
  %1211 = vst [vmem:[%s1210] sm:$0xf] %v1209
  %1212 = vst [vmem:[#allocation2] sm:$0xff] %v1208
  %1213 = vst [vmem:[#allocation3] sm:$0xff] %v1203
  // Predicated region
  $region14: #{lstm_forward.2} parent=0 // pred_check
    _
  $region15: #{lstm_forward.2} parent=0 // pred_check_branch
    %1215 = sbr.rel (0) target = $region17
  $region16: #{lstm_forward.2} parent=0 // pred_region
    _
  $region17: #{lstm_forward.2} parent=0 // pred_fallthru
    _
  // Predicated region
  $region18: #{lstm_forward.2} parent=0 // pred_check
    _
  $region19: #{lstm_forward.2} parent=0 // pred_check_branch
    %1217 = sbr.rel (0) target = $region21
  $region20: #{lstm_forward.2} parent=0 // pred_region
    _
  $region21: #{lstm_forward.2} parent=0 // pred_fallthru
    _

</llo_original>
